<compile_context>
chip_gen: v5e
topology: v5e:2x2
jax: 0.10.0
libtpu: 0.0.40
codegen_flags: <defaults>
</compile_context>

<pallas_src>
import functools

import jax
import jax.numpy as jnp
import numpy as np
from jax import lax
from jax.experimental import pallas as pl
from jax.experimental.pallas import tpu as pltpu

EPS = 1e-5


def _round_up(a, m):
    return ((a + m - 1) // m) * m


# --------------------------------- kernels ---------------------------------- #

def conv_pool_stats_kernel(xf_ref, w_ref, mask_ref, pmax_ref, pmin_ref,
                           stats_ref, *, Cout, Wh, P):
    """Per image: 3x3 conv (bf16 MXU, f32 acc) from a phase-separated padded
    input, per-2x2-window max/min of the conv output, and masked BN partials.

    xf_ref:    (1, 4, Cin, Lpi) bf16  xf[0, 2*ra+rb, c, u*Wh+v] = xpad[c, 2u+ra, 2v+rb]
    w_ref:     (9, Cout, Cin)   bf16  w[3*dh+dw, o, c] = weight[o, c, dh, dw]
    mask_ref:  (1, P)           f32   1.0 on valid pooled columns (wo < Wp)
    pmax_ref:  (1, Cout, P)     bf16  per-window max of the 4 conv phases
    pmin_ref:  (1, Cout, P)     bf16  per-window min of the 4 conv phases
    stats_ref: (1, 2, Cout)     f32   masked [sum, sum-of-squares] partials
    """
    x_all = xf_ref[0]                          # (4, Cin, Lpi) bf16
    w_all = w_ref[...]                         # (9, Cout, Cin) bf16
    mask = mask_ref[...]                       # (1, P) f32

    x_par = [x_all[p] for p in range(4)]       # (Cin, Lpi) per input parity
    w_tap = [w_all[t] for t in range(9)]       # (Cout, Cin) per conv tap

    # The 16 distinct input windows: row-tap tr = a+dh, col-tap tc = b+dw.
    rhs = {}
    for tr in range(4):
        for tc in range(4):
            par = (tr % 2) * 2 + (tc % 2)
            off = (tr // 2) * Wh + (tc // 2)
            rhs[(tr, tc)] = x_par[par][:, off:off + P]     # (Cin, P) bf16

    # Conv output for the 4 pool phases (a, b) of every 2x2 pooling window.
    accs = []
    for a in range(2):
        for b in range(2):
            acc = jnp.zeros((Cout, P), jnp.float32)
            for dh in range(3):
                for dw in range(3):
                    acc = acc + jnp.dot(w_tap[3 * dh + dw],
                                        rhs[(a + dh, b + dw)],
                                        preferred_element_type=jnp.float32)
            accs.append(acc)

    # Fused MaxPool2d(2,2): keep max AND min of the window (the BN+ReLU epilogue
    # picks max or min per channel depending on sign(scale)).
    pmax = jnp.maximum(jnp.maximum(accs[0], accs[1]),
                       jnp.maximum(accs[2], accs[3]))
    pmin = jnp.minimum(jnp.minimum(accs[0], accs[1]),
                       jnp.minimum(accs[2], accs[3]))
    pmax_ref[0] = pmax.astype(pmax_ref.dtype)
    pmin_ref[0] = pmin.astype(pmin_ref.dtype)

    # BN batch-stat partials over the (pre-pool) conv output, in f32 (computed
    # before the bf16 cast of the pooled values), masked so the per-row scratch
    # column (wo >= Wp) is excluded.
    # TODO(synk): one-pass E[x^2]-E[x]^2 can cancel for huge batches / large
    #             |mean|; switch to a shifted/two-pass form if tolerances tighten.
    s = jnp.zeros((Cout,), jnp.float32)
    q = jnp.zeros((Cout,), jnp.float32)
    for acc in accs:
        am = acc * mask
        s = s + jnp.sum(am, axis=1)
        q = q + jnp.sum(acc * am, axis=1)
    stats_ref[0, 0:1, :] = s[None, :]
    stats_ref[0, 1:2, :] = q[None, :]


def bn_relu_select_kernel(pmax_ref, pmin_ref, scale_ref, shift_ref, o_ref):
    """Elementwise epilogue: z = window-max if scale>=0 else window-min;
    out = relu(scale * z + shift)."""
    s = scale_ref[...]                                     # (Cout, 1) f32
    t = shift_ref[...]                                     # (Cout, 1) f32
    zmax = pmax_ref[0].astype(jnp.float32)                 # (Cout, P)
    zmin = pmin_ref[0].astype(jnp.float32)
    z = jnp.where(s >= 0.0, zmax, zmin)
    o_ref[0] = jnp.maximum(z * s + t, 0.0)


# --------------------------------- wrapper ----------------------------------- #

def conv_block_forward(x_nchw, weight_oihw, gamma, beta):
    """x_nchw: (N, Cin, H, W) f32; weight_oihw: (Cout, Cin, 3, 3);
    returns (N, Cout, H//2, W//2) f32 (training-mode BN batch statistics)."""
    N, Cin, H, W = x_nchw.shape
    Cout = weight_oihw.shape[0]
    assert H % 2 == 0 and W % 2 == 0, "MaxPool2d(2,2) layout assumes even H, W"
    Hp, Wp = H // 2, W // 2                  # pooled output spatial dims
    Hh, Wh = (H + 2) // 2, (W + 2) // 2      # padded image split by parity
    Lh = Hh * Wh                             # flat (u, v) length per parity
    P = Hp * Wh                              # per-image compute/output width
    Lpi = _round_up(Lh + 1, 128)             # + tap overhang, lane-rounded

    # ---- host layout prep: a single pass over the input, NO duplication ----
    # xf[n, 2*ra+rb, c, u*Wh+v] = xpad[n, c, 2u+ra, 2v+rb]   (pure permutation)
    xp = jnp.pad(x_nchw, ((0, 0), (0, 0), (1, 1), (1, 1)))
    xr = xp.reshape(N, Cin, Hh, 2, Wh, 2)
    xr = jnp.transpose(xr, (0, 3, 5, 1, 2, 4))               # (N, ra, rb, Cin, Hh, Wh)
    xf = xr.reshape(N, 4, Cin, Lh)
    xf = jnp.pad(xf, ((0, 0), (0, 0), (0, 0), (0, Lpi - Lh))).astype(jnp.bfloat16)

    w9 = jnp.transpose(weight_oihw, (2, 3, 0, 1)).reshape(9, Cout, Cin)
    w9 = w9.astype(jnp.bfloat16)

    # Valid-column mask: pooled columns wo >= Wp are per-row scratch.
    mask = ((jnp.arange(P) % Wh) < Wp).astype(jnp.float32).reshape(1, P)

    # ---- kernel 1: conv + fused max/min pool + BN partials, one image/step ----
    kernel1 = functools.partial(conv_pool_stats_kernel, Cout=Cout, Wh=Wh, P=P)
    pmax, pmin, stats = pl.pallas_call(
        kernel1,
        out_shape=(
            jax.ShapeDtypeStruct((N, Cout, P), jnp.bfloat16),
            jax.ShapeDtypeStruct((N, Cout, P), jnp.bfloat16),
            jax.ShapeDtypeStruct((N, 2, Cout), jnp.float32),
        ),
        grid_spec=pltpu.PrefetchScalarGridSpec(
            num_scalar_prefetch=0,
            grid=(N,),
            in_specs=[
                pl.BlockSpec((1, 4, Cin, Lpi), lambda n: (n, 0, 0, 0)),
                pl.BlockSpec((9, Cout, Cin), lambda n: (0, 0, 0)),
                pl.BlockSpec((1, P), lambda n: (0, 0)),
            ],
            out_specs=(
                pl.BlockSpec((1, Cout, P), lambda n: (n, 0, 0)),
                pl.BlockSpec((1, Cout, P), lambda n: (n, 0, 0)),
                pl.BlockSpec((1, 2, Cout), lambda n: (n, 0, 0)),
            ),
        ),
        # Per-step VMEM footprint is tiny (KB..~MB), so the default scoped VMEM
        # limit is ample on v5e/v6e/v7x; no explicit vmem_limit_bytes needed.
        compiler_params=pltpu.CompilerParams(
            dimension_semantics=("parallel",),
        ),
    )(xf, w9, mask)

    # ---- fold global batch stats into a per-channel affine (tiny XLA ops) ----
    cnt = float(N * H * W)
    tot = jnp.sum(stats, axis=0)                              # (2, Cout)
    mean = tot[0] / cnt
    var = jnp.maximum(tot[1] / cnt - mean * mean, 0.0)        # biased (training)
    inv_std = lax.rsqrt(var + EPS)
    g = gamma.astype(jnp.float32)
    b = beta.astype(jnp.float32)
    scale = (g * inv_std).reshape(Cout, 1)
    shift = (b - mean * g * inv_std).reshape(Cout, 1)

    # ---- kernel 2: pick max/min by sign(scale), affine, ReLU (elementwise) ----
    out_flat = pl.pallas_call(
        bn_relu_select_kernel,
        out_shape=jax.ShapeDtypeStruct((N, Cout, P), jnp.float32),
        grid_spec=pltpu.PrefetchScalarGridSpec(
            num_scalar_prefetch=0,
            grid=(N,),
            in_specs=[
                pl.BlockSpec((1, Cout, P), lambda n: (n, 0, 0)),
                pl.BlockSpec((1, Cout, P), lambda n: (n, 0, 0)),
                pl.BlockSpec((Cout, 1), lambda n: (0, 0)),
                pl.BlockSpec((Cout, 1), lambda n: (0, 0)),
            ],
            out_specs=pl.BlockSpec((1, Cout, P), lambda n: (n, 0, 0)),
        ),
        compiler_params=pltpu.CompilerParams(
            dimension_semantics=("parallel",),
        ),
    )(pmax, pmin, scale, shift)

    # Drop the per-row scratch column; small pooled-size XLA op only.
    out = out_flat.reshape(N, Cout, Hp, Wh)[..., :Wp]
    return out


# -------------------------------- reference ---------------------------------- #

def reference_forward(x_nchw, weight_oihw, gamma, beta):
    """Pure-JAX reference matching PyTorch ConvBlock forward (training-mode BN)."""
    y = lax.conv_general_dilated(
        x_nchw, weight_oihw, window_strides=(1, 1), padding=((1, 1), (1, 1)),
        dimension_numbers=("NCHW", "OIHW", "NCHW"), precision=lax.Precision.HIGHEST)
    mean = jnp.mean(y, axis=(0, 2, 3), keepdims=True)
    var = jnp.mean((y - mean) ** 2, axis=(0, 2, 3), keepdims=True)
    y = (y - mean) / jnp.sqrt(var + EPS) * gamma.reshape(1, -1, 1, 1) + beta.reshape(1, -1, 1, 1)
    y = jnp.maximum(y, 0.0)
    y = lax.reduce_window(y, -jnp.inf, lax.max, (1, 1, 2, 2), (1, 1, 2, 2), "VALID")
    return y


if __name__ == "__main__":
    key = jax.random.PRNGKey(0)
    kx, kw = jax.random.split(key)

    N, Cin, Cout, H, W = 2, 4, 8, 16, 16
    x = jax.random.normal(kx, (N, Cin, H, W), dtype=jnp.float32)
    fan_in = Cin * 3 * 3
    weight = jax.random.normal(kw, (Cout, Cin, 3, 3), dtype=jnp.float32) * np.sqrt(2.0 / fan_in)
    gamma = jnp.ones((Cout,), dtype=jnp.float32)
    beta = jnp.zeros((Cout,), dtype=jnp.float32)

    out = conv_block_forward(x, weight, gamma, beta)
    out = jax.block_until_ready(out)

    ref = jax.block_until_ready(reference_forward(x, weight, gamma, beta))
    assert out.shape == (N, Cout, H // 2, W // 2), out.shape
    np.testing.assert_allclose(np.asarray(out), np.asarray(ref), rtol=2e-2, atol=2e-2)

    print("KERNEL_OK")
</pallas_src>

<mosaic_0001>
module attributes {stable_mosaic.version = 11 : i64} {
  func.func @conv_pool_stats_kernel(%arg0: i32, %arg1: memref<1x4x4x128xbf16, #tpu.memory_space<vmem>>, %arg2: memref<9x8x4xbf16, #tpu.memory_space<vmem>>, %arg3: memref<1x72xf32, #tpu.memory_space<vmem>>, %arg4: memref<1x8x72xbf16, #tpu.memory_space<vmem>>, %arg5: memref<1x8x72xbf16, #tpu.memory_space<vmem>>, %arg6: memref<1x2x8xf32, #tpu.memory_space<vmem>>) attributes {dimension_semantics = [#tpu.dimension_semantics<parallel>], iteration_bounds = array<i64: 2>, scalar_prefetch = 0 : i64, scratch_operands = 0 : i64, tpu.core_type = #tpu.core_type<tc>, window_params = [{transform_indices = @transform_0, window_bounds = array<i64: 1, 4, 4, 128>}, {pipeline_mode = #tpu.pipeline_mode<synchronous>, transform_indices = @transform_1, window_bounds = array<i64: 9, 8, 4>}, {pipeline_mode = #tpu.pipeline_mode<synchronous>, transform_indices = @transform_2, window_bounds = array<i64: 1, 72>}, {transform_indices = @transform_3, window_bounds = array<i64: 1, 8, 72>}, {transform_indices = @transform_4, window_bounds = array<i64: 1, 8, 72>}, {transform_indices = @transform_5, window_bounds = array<i64: 1, 2, 8>}]} {
    %c0 = arith.constant 0 : index
    %c0_0 = arith.constant 0 : index
    %c0_1 = arith.constant 0 : index
    %c0_2 = arith.constant 0 : index
    %0 = vector.load %arg1[%c0, %c0_0, %c0_1, %c0_2] : memref<1x4x4x128xbf16, #tpu.memory_space<vmem>>, vector<1x4x4x128xbf16>
    %1 = vector.shape_cast %0 : vector<1x4x4x128xbf16> to vector<4x4x128xbf16>
    %c0_3 = arith.constant 0 : index
    %c0_4 = arith.constant 0 : index
    %c0_5 = arith.constant 0 : index
    %2 = vector.load %arg2[%c0_3, %c0_4, %c0_5] : memref<9x8x4xbf16, #tpu.memory_space<vmem>>, vector<9x8x4xbf16>
    %c0_6 = arith.constant 0 : index
    %c0_7 = arith.constant 0 : index
    %3 = vector.load %arg3[%c0_6, %c0_7] : memref<1x72xf32, #tpu.memory_space<vmem>>, vector<1x72xf32>
    %4 = vector.extract_strided_slice %1 {offsets = [0, 0, 0], sizes = [1, 4, 128], strides = [1, 1, 1]} : vector<4x4x128xbf16> to vector<1x4x128xbf16>
    %5 = vector.shape_cast %4 : vector<1x4x128xbf16> to vector<4x128xbf16>
    %6 = vector.extract_strided_slice %1 {offsets = [1, 0, 0], sizes = [1, 4, 128], strides = [1, 1, 1]} : vector<4x4x128xbf16> to vector<1x4x128xbf16>
    %7 = vector.shape_cast %6 : vector<1x4x128xbf16> to vector<4x128xbf16>
    %8 = vector.extract_strided_slice %1 {offsets = [2, 0, 0], sizes = [1, 4, 128], strides = [1, 1, 1]} : vector<4x4x128xbf16> to vector<1x4x128xbf16>
    %9 = vector.shape_cast %8 : vector<1x4x128xbf16> to vector<4x128xbf16>
    %10 = vector.extract_strided_slice %1 {offsets = [3, 0, 0], sizes = [1, 4, 128], strides = [1, 1, 1]} : vector<4x4x128xbf16> to vector<1x4x128xbf16>
    %11 = vector.shape_cast %10 : vector<1x4x128xbf16> to vector<4x128xbf16>
    %12 = vector.extract_strided_slice %2 {offsets = [0, 0, 0], sizes = [1, 8, 4], strides = [1, 1, 1]} : vector<9x8x4xbf16> to vector<1x8x4xbf16>
    %13 = vector.shape_cast %12 : vector<1x8x4xbf16> to vector<8x4xbf16>
    %14 = vector.extract_strided_slice %2 {offsets = [1, 0, 0], sizes = [1, 8, 4], strides = [1, 1, 1]} : vector<9x8x4xbf16> to vector<1x8x4xbf16>
    %15 = vector.shape_cast %14 : vector<1x8x4xbf16> to vector<8x4xbf16>
    %16 = vector.extract_strided_slice %2 {offsets = [2, 0, 0], sizes = [1, 8, 4], strides = [1, 1, 1]} : vector<9x8x4xbf16> to vector<1x8x4xbf16>
    %17 = vector.shape_cast %16 : vector<1x8x4xbf16> to vector<8x4xbf16>
    %18 = vector.extract_strided_slice %2 {offsets = [3, 0, 0], sizes = [1, 8, 4], strides = [1, 1, 1]} : vector<9x8x4xbf16> to vector<1x8x4xbf16>
    %19 = vector.shape_cast %18 : vector<1x8x4xbf16> to vector<8x4xbf16>
    %20 = vector.extract_strided_slice %2 {offsets = [4, 0, 0], sizes = [1, 8, 4], strides = [1, 1, 1]} : vector<9x8x4xbf16> to vector<1x8x4xbf16>
    %21 = vector.shape_cast %20 : vector<1x8x4xbf16> to vector<8x4xbf16>
    %22 = vector.extract_strided_slice %2 {offsets = [5, 0, 0], sizes = [1, 8, 4], strides = [1, 1, 1]} : vector<9x8x4xbf16> to vector<1x8x4xbf16>
    %23 = vector.shape_cast %22 : vector<1x8x4xbf16> to vector<8x4xbf16>
    %24 = vector.extract_strided_slice %2 {offsets = [6, 0, 0], sizes = [1, 8, 4], strides = [1, 1, 1]} : vector<9x8x4xbf16> to vector<1x8x4xbf16>
    %25 = vector.shape_cast %24 : vector<1x8x4xbf16> to vector<8x4xbf16>
    %26 = vector.extract_strided_slice %2 {offsets = [7, 0, 0], sizes = [1, 8, 4], strides = [1, 1, 1]} : vector<9x8x4xbf16> to vector<1x8x4xbf16>
    %27 = vector.shape_cast %26 : vector<1x8x4xbf16> to vector<8x4xbf16>
    %28 = vector.extract_strided_slice %2 {offsets = [8, 0, 0], sizes = [1, 8, 4], strides = [1, 1, 1]} : vector<9x8x4xbf16> to vector<1x8x4xbf16>
    %29 = vector.shape_cast %28 : vector<1x8x4xbf16> to vector<8x4xbf16>
    %30 = vector.extract_strided_slice %5 {offsets = [0, 0], sizes = [4, 72], strides = [1, 1]} : vector<4x128xbf16> to vector<4x72xbf16>
    %31 = vector.extract_strided_slice %7 {offsets = [0, 0], sizes = [4, 72], strides = [1, 1]} : vector<4x128xbf16> to vector<4x72xbf16>
    %32 = vector.extract_strided_slice %5 {offsets = [0, 1], sizes = [4, 72], strides = [1, 1]} : vector<4x128xbf16> to vector<4x72xbf16>
    %33 = vector.extract_strided_slice %7 {offsets = [0, 1], sizes = [4, 72], strides = [1, 1]} : vector<4x128xbf16> to vector<4x72xbf16>
    %34 = vector.extract_strided_slice %9 {offsets = [0, 0], sizes = [4, 72], strides = [1, 1]} : vector<4x128xbf16> to vector<4x72xbf16>
    %35 = vector.extract_strided_slice %11 {offsets = [0, 0], sizes = [4, 72], strides = [1, 1]} : vector<4x128xbf16> to vector<4x72xbf16>
    %36 = vector.extract_strided_slice %9 {offsets = [0, 1], sizes = [4, 72], strides = [1, 1]} : vector<4x128xbf16> to vector<4x72xbf16>
    %37 = vector.extract_strided_slice %11 {offsets = [0, 1], sizes = [4, 72], strides = [1, 1]} : vector<4x128xbf16> to vector<4x72xbf16>
    %38 = vector.extract_strided_slice %5 {offsets = [0, 9], sizes = [4, 72], strides = [1, 1]} : vector<4x128xbf16> to vector<4x72xbf16>
    %39 = vector.extract_strided_slice %7 {offsets = [0, 9], sizes = [4, 72], strides = [1, 1]} : vector<4x128xbf16> to vector<4x72xbf16>
    %40 = vector.extract_strided_slice %5 {offsets = [0, 10], sizes = [4, 72], strides = [1, 1]} : vector<4x128xbf16> to vector<4x72xbf16>
    %41 = vector.extract_strided_slice %7 {offsets = [0, 10], sizes = [4, 72], strides = [1, 1]} : vector<4x128xbf16> to vector<4x72xbf16>
    %42 = vector.extract_strided_slice %9 {offsets = [0, 9], sizes = [4, 72], strides = [1, 1]} : vector<4x128xbf16> to vector<4x72xbf16>
    %43 = vector.extract_strided_slice %11 {offsets = [0, 9], sizes = [4, 72], strides = [1, 1]} : vector<4x128xbf16> to vector<4x72xbf16>
    %44 = vector.extract_strided_slice %9 {offsets = [0, 10], sizes = [4, 72], strides = [1, 1]} : vector<4x128xbf16> to vector<4x72xbf16>
    %45 = vector.extract_strided_slice %11 {offsets = [0, 10], sizes = [4, 72], strides = [1, 1]} : vector<4x128xbf16> to vector<4x72xbf16>
    %cst = arith.constant 0.000000e+00 : f32
    %46 = vector.broadcast %cst : f32 to vector<8x72xf32>
    %cst_8 = arith.constant dense<0.000000e+00> : vector<8x72xf32>
    %47 = tpu.matmul %13, %30, %cst_8 {dimension_numbers = #tpu.dot_dimension_numbers<[1], [0], [0], [1], [0, 0, 1, 1], [], []>} : vector<8x4xbf16>, vector<4x72xbf16>, vector<8x72xf32> -> vector<8x72xf32>
    %48 = arith.addf %46, %47 : vector<8x72xf32>
    %cst_9 = arith.constant dense<0.000000e+00> : vector<8x72xf32>
    %49 = tpu.matmul %15, %31, %cst_9 {dimension_numbers = #tpu.dot_dimension_numbers<[1], [0], [0], [1], [0, 0, 1, 1], [], []>} : vector<8x4xbf16>, vector<4x72xbf16>, vector<8x72xf32> -> vector<8x72xf32>
    %50 = arith.addf %48, %49 : vector<8x72xf32>
    %cst_10 = arith.constant dense<0.000000e+00> : vector<8x72xf32>
    %51 = tpu.matmul %17, %32, %cst_10 {dimension_numbers = #tpu.dot_dimension_numbers<[1], [0], [0], [1], [0, 0, 1, 1], [], []>} : vector<8x4xbf16>, vector<4x72xbf16>, vector<8x72xf32> -> vector<8x72xf32>
    %52 = arith.addf %50, %51 : vector<8x72xf32>
    %cst_11 = arith.constant dense<0.000000e+00> : vector<8x72xf32>
    %53 = tpu.matmul %19, %34, %cst_11 {dimension_numbers = #tpu.dot_dimension_numbers<[1], [0], [0], [1], [0, 0, 1, 1], [], []>} : vector<8x4xbf16>, vector<4x72xbf16>, vector<8x72xf32> -> vector<8x72xf32>
    %54 = arith.addf %52, %53 : vector<8x72xf32>
    %cst_12 = arith.constant dense<0.000000e+00> : vector<8x72xf32>
    %55 = tpu.matmul %21, %35, %cst_12 {dimension_numbers = #tpu.dot_dimension_numbers<[1], [0], [0], [1], [0, 0, 1, 1], [], []>} : vector<8x4xbf16>, vector<4x72xbf16>, vector<8x72xf32> -> vector<8x72xf32>
    %56 = arith.addf %54, %55 : vector<8x72xf32>
    %cst_13 = arith.constant dense<0.000000e+00> : vector<8x72xf32>
    %57 = tpu.matmul %23, %36, %cst_13 {dimension_numbers = #tpu.dot_dimension_numbers<[1], [0], [0], [1], [0, 0, 1, 1], [], []>} : vector<8x4xbf16>, vector<4x72xbf16>, vector<8x72xf32> -> vector<8x72xf32>
    %58 = arith.addf %56, %57 : vector<8x72xf32>
    %cst_14 = arith.constant dense<0.000000e+00> : vector<8x72xf32>
    %59 = tpu.matmul %25, %38, %cst_14 {dimension_numbers = #tpu.dot_dimension_numbers<[1], [0], [0], [1], [0, 0, 1, 1], [], []>} : vector<8x4xbf16>, vector<4x72xbf16>, vector<8x72xf32> -> vector<8x72xf32>
    %60 = arith.addf %58, %59 : vector<8x72xf32>
    %cst_15 = arith.constant dense<0.000000e+00> : vector<8x72xf32>
    %61 = tpu.matmul %27, %39, %cst_15 {dimension_numbers = #tpu.dot_dimension_numbers<[1], [0], [0], [1], [0, 0, 1, 1], [], []>} : vector<8x4xbf16>, vector<4x72xbf16>, vector<8x72xf32> -> vector<8x72xf32>
    %62 = arith.addf %60, %61 : vector<8x72xf32>
    %cst_16 = arith.constant dense<0.000000e+00> : vector<8x72xf32>
    %63 = tpu.matmul %29, %40, %cst_16 {dimension_numbers = #tpu.dot_dimension_numbers<[1], [0], [0], [1], [0, 0, 1, 1], [], []>} : vector<8x4xbf16>, vector<4x72xbf16>, vector<8x72xf32> -> vector<8x72xf32>
    %64 = arith.addf %62, %63 : vector<8x72xf32>
    %cst_17 = arith.constant 0.000000e+00 : f32
    %65 = vector.broadcast %cst_17 : f32 to vector<8x72xf32>
    %cst_18 = arith.constant dense<0.000000e+00> : vector<8x72xf32>
    %66 = tpu.matmul %13, %31, %cst_18 {dimension_numbers = #tpu.dot_dimension_numbers<[1], [0], [0], [1], [0, 0, 1, 1], [], []>} : vector<8x4xbf16>, vector<4x72xbf16>, vector<8x72xf32> -> vector<8x72xf32>
    %67 = arith.addf %65, %66 : vector<8x72xf32>
    %cst_19 = arith.constant dense<0.000000e+00> : vector<8x72xf32>
    %68 = tpu.matmul %15, %32, %cst_19 {dimension_numbers = #tpu.dot_dimension_numbers<[1], [0], [0], [1], [0, 0, 1, 1], [], []>} : vector<8x4xbf16>, vector<4x72xbf16>, vector<8x72xf32> -> vector<8x72xf32>
    %69 = arith.addf %67, %68 : vector<8x72xf32>
    %cst_20 = arith.constant dense<0.000000e+00> : vector<8x72xf32>
    %70 = tpu.matmul %17, %33, %cst_20 {dimension_numbers = #tpu.dot_dimension_numbers<[1], [0], [0], [1], [0, 0, 1, 1], [], []>} : vector<8x4xbf16>, vector<4x72xbf16>, vector<8x72xf32> -> vector<8x72xf32>
    %71 = arith.addf %69, %70 : vector<8x72xf32>
    %cst_21 = arith.constant dense<0.000000e+00> : vector<8x72xf32>
    %72 = tpu.matmul %19, %35, %cst_21 {dimension_numbers = #tpu.dot_dimension_numbers<[1], [0], [0], [1], [0, 0, 1, 1], [], []>} : vector<8x4xbf16>, vector<4x72xbf16>, vector<8x72xf32> -> vector<8x72xf32>
    %73 = arith.addf %71, %72 : vector<8x72xf32>
    %cst_22 = arith.constant dense<0.000000e+00> : vector<8x72xf32>
    %74 = tpu.matmul %21, %36, %cst_22 {dimension_numbers = #tpu.dot_dimension_numbers<[1], [0], [0], [1], [0, 0, 1, 1], [], []>} : vector<8x4xbf16>, vector<4x72xbf16>, vector<8x72xf32> -> vector<8x72xf32>
    %75 = arith.addf %73, %74 : vector<8x72xf32>
    %cst_23 = arith.constant dense<0.000000e+00> : vector<8x72xf32>
    %76 = tpu.matmul %23, %37, %cst_23 {dimension_numbers = #tpu.dot_dimension_numbers<[1], [0], [0], [1], [0, 0, 1, 1], [], []>} : vector<8x4xbf16>, vector<4x72xbf16>, vector<8x72xf32> -> vector<8x72xf32>
    %77 = arith.addf %75, %76 : vector<8x72xf32>
    %cst_24 = arith.constant dense<0.000000e+00> : vector<8x72xf32>
    %78 = tpu.matmul %25, %39, %cst_24 {dimension_numbers = #tpu.dot_dimension_numbers<[1], [0], [0], [1], [0, 0, 1, 1], [], []>} : vector<8x4xbf16>, vector<4x72xbf16>, vector<8x72xf32> -> vector<8x72xf32>
    %79 = arith.addf %77, %78 : vector<8x72xf32>
    %cst_25 = arith.constant dense<0.000000e+00> : vector<8x72xf32>
    %80 = tpu.matmul %27, %40, %cst_25 {dimension_numbers = #tpu.dot_dimension_numbers<[1], [0], [0], [1], [0, 0, 1, 1], [], []>} : vector<8x4xbf16>, vector<4x72xbf16>, vector<8x72xf32> -> vector<8x72xf32>
    %81 = arith.addf %79, %80 : vector<8x72xf32>
    %cst_26 = arith.constant dense<0.000000e+00> : vector<8x72xf32>
    %82 = tpu.matmul %29, %41, %cst_26 {dimension_numbers = #tpu.dot_dimension_numbers<[1], [0], [0], [1], [0, 0, 1, 1], [], []>} : vector<8x4xbf16>, vector<4x72xbf16>, vector<8x72xf32> -> vector<8x72xf32>
    %83 = arith.addf %81, %82 : vector<8x72xf32>
    %cst_27 = arith.constant 0.000000e+00 : f32
    %84 = vector.broadcast %cst_27 : f32 to vector<8x72xf32>
    %cst_28 = arith.constant dense<0.000000e+00> : vector<8x72xf32>
    %85 = tpu.matmul %13, %34, %cst_28 {dimension_numbers = #tpu.dot_dimension_numbers<[1], [0], [0], [1], [0, 0, 1, 1], [], []>} : vector<8x4xbf16>, vector<4x72xbf16>, vector<8x72xf32> -> vector<8x72xf32>
    %86 = arith.addf %84, %85 : vector<8x72xf32>
    %cst_29 = arith.constant dense<0.000000e+00> : vector<8x72xf32>
    %87 = tpu.matmul %15, %35, %cst_29 {dimension_numbers = #tpu.dot_dimension_numbers<[1], [0], [0], [1], [0, 0, 1, 1], [], []>} : vector<8x4xbf16>, vector<4x72xbf16>, vector<8x72xf32> -> vector<8x72xf32>
    %88 = arith.addf %86, %87 : vector<8x72xf32>
    %cst_30 = arith.constant dense<0.000000e+00> : vector<8x72xf32>
    %89 = tpu.matmul %17, %36, %cst_30 {dimension_numbers = #tpu.dot_dimension_numbers<[1], [0], [0], [1], [0, 0, 1, 1], [], []>} : vector<8x4xbf16>, vector<4x72xbf16>, vector<8x72xf32> -> vector<8x72xf32>
    %90 = arith.addf %88, %89 : vector<8x72xf32>
    %cst_31 = arith.constant dense<0.000000e+00> : vector<8x72xf32>
    %91 = tpu.matmul %19, %38, %cst_31 {dimension_numbers = #tpu.dot_dimension_numbers<[1], [0], [0], [1], [0, 0, 1, 1], [], []>} : vector<8x4xbf16>, vector<4x72xbf16>, vector<8x72xf32> -> vector<8x72xf32>
    %92 = arith.addf %90, %91 : vector<8x72xf32>
    %cst_32 = arith.constant dense<0.000000e+00> : vector<8x72xf32>
    %93 = tpu.matmul %21, %39, %cst_32 {dimension_numbers = #tpu.dot_dimension_numbers<[1], [0], [0], [1], [0, 0, 1, 1], [], []>} : vector<8x4xbf16>, vector<4x72xbf16>, vector<8x72xf32> -> vector<8x72xf32>
    %94 = arith.addf %92, %93 : vector<8x72xf32>
    %cst_33 = arith.constant dense<0.000000e+00> : vector<8x72xf32>
    %95 = tpu.matmul %23, %40, %cst_33 {dimension_numbers = #tpu.dot_dimension_numbers<[1], [0], [0], [1], [0, 0, 1, 1], [], []>} : vector<8x4xbf16>, vector<4x72xbf16>, vector<8x72xf32> -> vector<8x72xf32>
    %96 = arith.addf %94, %95 : vector<8x72xf32>
    %cst_34 = arith.constant dense<0.000000e+00> : vector<8x72xf32>
    %97 = tpu.matmul %25, %42, %cst_34 {dimension_numbers = #tpu.dot_dimension_numbers<[1], [0], [0], [1], [0, 0, 1, 1], [], []>} : vector<8x4xbf16>, vector<4x72xbf16>, vector<8x72xf32> -> vector<8x72xf32>
    %98 = arith.addf %96, %97 : vector<8x72xf32>
    %cst_35 = arith.constant dense<0.000000e+00> : vector<8x72xf32>
    %99 = tpu.matmul %27, %43, %cst_35 {dimension_numbers = #tpu.dot_dimension_numbers<[1], [0], [0], [1], [0, 0, 1, 1], [], []>} : vector<8x4xbf16>, vector<4x72xbf16>, vector<8x72xf32> -> vector<8x72xf32>
    %100 = arith.addf %98, %99 : vector<8x72xf32>
    %cst_36 = arith.constant dense<0.000000e+00> : vector<8x72xf32>
    %101 = tpu.matmul %29, %44, %cst_36 {dimension_numbers = #tpu.dot_dimension_numbers<[1], [0], [0], [1], [0, 0, 1, 1], [], []>} : vector<8x4xbf16>, vector<4x72xbf16>, vector<8x72xf32> -> vector<8x72xf32>
    %102 = arith.addf %100, %101 : vector<8x72xf32>
    %cst_37 = arith.constant 0.000000e+00 : f32
    %103 = vector.broadcast %cst_37 : f32 to vector<8x72xf32>
    %cst_38 = arith.constant dense<0.000000e+00> : vector<8x72xf32>
    %104 = tpu.matmul %13, %35, %cst_38 {dimension_numbers = #tpu.dot_dimension_numbers<[1], [0], [0], [1], [0, 0, 1, 1], [], []>} : vector<8x4xbf16>, vector<4x72xbf16>, vector<8x72xf32> -> vector<8x72xf32>
    %105 = arith.addf %103, %104 : vector<8x72xf32>
    %cst_39 = arith.constant dense<0.000000e+00> : vector<8x72xf32>
    %106 = tpu.matmul %15, %36, %cst_39 {dimension_numbers = #tpu.dot_dimension_numbers<[1], [0], [0], [1], [0, 0, 1, 1], [], []>} : vector<8x4xbf16>, vector<4x72xbf16>, vector<8x72xf32> -> vector<8x72xf32>
    %107 = arith.addf %105, %106 : vector<8x72xf32>
    %cst_40 = arith.constant dense<0.000000e+00> : vector<8x72xf32>
    %108 = tpu.matmul %17, %37, %cst_40 {dimension_numbers = #tpu.dot_dimension_numbers<[1], [0], [0], [1], [0, 0, 1, 1], [], []>} : vector<8x4xbf16>, vector<4x72xbf16>, vector<8x72xf32> -> vector<8x72xf32>
    %109 = arith.addf %107, %108 : vector<8x72xf32>
    %cst_41 = arith.constant dense<0.000000e+00> : vector<8x72xf32>
    %110 = tpu.matmul %19, %39, %cst_41 {dimension_numbers = #tpu.dot_dimension_numbers<[1], [0], [0], [1], [0, 0, 1, 1], [], []>} : vector<8x4xbf16>, vector<4x72xbf16>, vector<8x72xf32> -> vector<8x72xf32>
    %111 = arith.addf %109, %110 : vector<8x72xf32>
    %cst_42 = arith.constant dense<0.000000e+00> : vector<8x72xf32>
    %112 = tpu.matmul %21, %40, %cst_42 {dimension_numbers = #tpu.dot_dimension_numbers<[1], [0], [0], [1], [0, 0, 1, 1], [], []>} : vector<8x4xbf16>, vector<4x72xbf16>, vector<8x72xf32> -> vector<8x72xf32>
    %113 = arith.addf %111, %112 : vector<8x72xf32>
    %cst_43 = arith.constant dense<0.000000e+00> : vector<8x72xf32>
    %114 = tpu.matmul %23, %41, %cst_43 {dimension_numbers = #tpu.dot_dimension_numbers<[1], [0], [0], [1], [0, 0, 1, 1], [], []>} : vector<8x4xbf16>, vector<4x72xbf16>, vector<8x72xf32> -> vector<8x72xf32>
    %115 = arith.addf %113, %114 : vector<8x72xf32>
    %cst_44 = arith.constant dense<0.000000e+00> : vector<8x72xf32>
    %116 = tpu.matmul %25, %43, %cst_44 {dimension_numbers = #tpu.dot_dimension_numbers<[1], [0], [0], [1], [0, 0, 1, 1], [], []>} : vector<8x4xbf16>, vector<4x72xbf16>, vector<8x72xf32> -> vector<8x72xf32>
    %117 = arith.addf %115, %116 : vector<8x72xf32>
    %cst_45 = arith.constant dense<0.000000e+00> : vector<8x72xf32>
    %118 = tpu.matmul %27, %44, %cst_45 {dimension_numbers = #tpu.dot_dimension_numbers<[1], [0], [0], [1], [0, 0, 1, 1], [], []>} : vector<8x4xbf16>, vector<4x72xbf16>, vector<8x72xf32> -> vector<8x72xf32>
    %119 = arith.addf %117, %118 : vector<8x72xf32>
    %cst_46 = arith.constant dense<0.000000e+00> : vector<8x72xf32>
    %120 = tpu.matmul %29, %45, %cst_46 {dimension_numbers = #tpu.dot_dimension_numbers<[1], [0], [0], [1], [0, 0, 1, 1], [], []>} : vector<8x4xbf16>, vector<4x72xbf16>, vector<8x72xf32> -> vector<8x72xf32>
    %121 = arith.addf %119, %120 : vector<8x72xf32>
    %122 = arith.maximumf %64, %83 : vector<8x72xf32>
    %123 = arith.maximumf %102, %121 : vector<8x72xf32>
    %124 = arith.maximumf %122, %123 : vector<8x72xf32>
    %125 = arith.minimumf %64, %83 : vector<8x72xf32>
    %126 = arith.minimumf %102, %121 : vector<8x72xf32>
    %127 = arith.minimumf %125, %126 : vector<8x72xf32>
    %128 = arith.truncf %124 : vector<8x72xf32> to vector<8x72xbf16>
    %c0_47 = arith.constant 0 : index
    %c0_48 = arith.constant 0 : index
    %c0_49 = arith.constant 0 : index
    %129 = vector.load %arg4[%c0_47, %c0_48, %c0_49] : memref<1x8x72xbf16, #tpu.memory_space<vmem>>, vector<1x8x72xbf16>
    %130 = vector.shape_cast %129 : vector<1x8x72xbf16> to vector<8x72xbf16>
    %131 = vector.shape_cast %128 : vector<8x72xbf16> to vector<1x8x72xbf16>
    tpu.vector_store %arg4[%c0_47, %c0_48, %c0_49], %131 {strides = array<i32>} : memref<1x8x72xbf16, #tpu.memory_space<vmem>>, vector<1x8x72xbf16>,
    %132 = arith.truncf %127 : vector<8x72xf32> to vector<8x72xbf16>
    %c0_50 = arith.constant 0 : index
    %c0_51 = arith.constant 0 : index
    %c0_52 = arith.constant 0 : index
    %133 = vector.load %arg5[%c0_50, %c0_51, %c0_52] : memref<1x8x72xbf16, #tpu.memory_space<vmem>>, vector<1x8x72xbf16>
    %134 = vector.shape_cast %133 : vector<1x8x72xbf16> to vector<8x72xbf16>
    %135 = vector.shape_cast %132 : vector<8x72xbf16> to vector<1x8x72xbf16>
    tpu.vector_store %arg5[%c0_50, %c0_51, %c0_52], %135 {strides = array<i32>} : memref<1x8x72xbf16, #tpu.memory_space<vmem>>, vector<1x8x72xbf16>,
    %cst_53 = arith.constant 0.000000e+00 : f32
    %136 = vector.broadcast %cst_53 : f32 to vector<8xf32>
    %cst_54 = arith.constant 0.000000e+00 : f32
    %137 = vector.broadcast %cst_54 : f32 to vector<8xf32>
    %138 = vector.broadcast %3 : vector<1x72xf32> to vector<8x72xf32>
    %139 = arith.mulf %64, %138 : vector<8x72xf32>
    %cst_55 = arith.constant dense<0.000000e+00> : vector<8xf32>
    %140 = vector.multi_reduction <add>, %139, %cst_55 [1] : vector<8x72xf32> to vector<8xf32>
    %141 = arith.addf %136, %140 : vector<8xf32>
    %142 = arith.mulf %64, %139 : vector<8x72xf32>
    %cst_56 = arith.constant dense<0.000000e+00> : vector<8xf32>
    %143 = vector.multi_reduction <add>, %142, %cst_56 [1] : vector<8x72xf32> to vector<8xf32>
    %144 = arith.addf %137, %143 : vector<8xf32>
    %145 = vector.broadcast %3 : vector<1x72xf32> to vector<8x72xf32>
    %146 = arith.mulf %83, %145 : vector<8x72xf32>
    %cst_57 = arith.constant dense<0.000000e+00> : vector<8xf32>
    %147 = vector.multi_reduction <add>, %146, %cst_57 [1] : vector<8x72xf32> to vector<8xf32>
    %148 = arith.addf %141, %147 : vector<8xf32>
    %149 = arith.mulf %83, %146 : vector<8x72xf32>
    %cst_58 = arith.constant dense<0.000000e+00> : vector<8xf32>
    %150 = vector.multi_reduction <add>, %149, %cst_58 [1] : vector<8x72xf32> to vector<8xf32>
    %151 = arith.addf %144, %150 : vector<8xf32>
    %152 = vector.broadcast %3 : vector<1x72xf32> to vector<8x72xf32>
    %153 = arith.mulf %102, %152 : vector<8x72xf32>
    %cst_59 = arith.constant dense<0.000000e+00> : vector<8xf32>
    %154 = vector.multi_reduction <add>, %153, %cst_59 [1] : vector<8x72xf32> to vector<8xf32>
    %155 = arith.addf %148, %154 : vector<8xf32>
    %156 = arith.mulf %102, %153 : vector<8x72xf32>
    %cst_60 = arith.constant dense<0.000000e+00> : vector<8xf32>
    %157 = vector.multi_reduction <add>, %156, %cst_60 [1] : vector<8x72xf32> to vector<8xf32>
    %158 = arith.addf %151, %157 : vector<8xf32>
    %159 = vector.broadcast %3 : vector<1x72xf32> to vector<8x72xf32>
    %160 = arith.mulf %121, %159 : vector<8x72xf32>
    %cst_61 = arith.constant dense<0.000000e+00> : vector<8xf32>
    %161 = vector.multi_reduction <add>, %160, %cst_61 [1] : vector<8x72xf32> to vector<8xf32>
    %162 = arith.addf %155, %161 : vector<8xf32>
    %163 = arith.mulf %121, %160 : vector<8x72xf32>
    %cst_62 = arith.constant dense<0.000000e+00> : vector<8xf32>
    %164 = vector.multi_reduction <add>, %163, %cst_62 [1] : vector<8x72xf32> to vector<8xf32>
    %165 = arith.addf %158, %164 : vector<8xf32>
    %166 = vector.shape_cast %162 : vector<8xf32> to vector<1x8xf32>
    %c0_63 = arith.constant 0 : index
    %c0_64 = arith.constant 0 : index
    %c0_65 = arith.constant 0 : index
    %167 = vector.load %arg6[%c0_63, %c0_64, %c0_65] : memref<1x2x8xf32, #tpu.memory_space<vmem>>, vector<1x1x8xf32>
    %168 = vector.shape_cast %167 : vector<1x1x8xf32> to vector<1x8xf32>
    %169 = vector.shape_cast %166 : vector<1x8xf32> to vector<1x1x8xf32>
    tpu.vector_store %arg6[%c0_63, %c0_64, %c0_65], %169 {strides = array<i32>} : memref<1x2x8xf32, #tpu.memory_space<vmem>>, vector<1x1x8xf32>,
    %170 = vector.shape_cast %165 : vector<8xf32> to vector<1x8xf32>
    %c0_66 = arith.constant 0 : index
    %c1 = arith.constant 1 : index
    %c0_67 = arith.constant 0 : index
    %171 = vector.load %arg6[%c0_66, %c1, %c0_67] : memref<1x2x8xf32, #tpu.memory_space<vmem>>, vector<1x1x8xf32>
    %172 = vector.shape_cast %171 : vector<1x1x8xf32> to vector<1x8xf32>
    %173 = vector.shape_cast %170 : vector<1x8xf32> to vector<1x1x8xf32>
    tpu.vector_store %arg6[%c0_66, %c1, %c0_67], %173 {strides = array<i32>} : memref<1x2x8xf32, #tpu.memory_space<vmem>>, vector<1x1x8xf32>,
    return
  }
  func.func @transform_0(%arg0: i32) -> (i32, i32, i32, i32) {
    %c0_i32 = arith.constant 0 : i32
    %c0_i32_0 = arith.constant 0 : i32
    %c0_i32_1 = arith.constant 0 : i32
    %c0_i32_2 = arith.constant 0 : i32
    return %arg0, %c0_i32, %c0_i32_0, %c0_i32_1 : i32, i32, i32, i32
  }
  func.func @transform_1(%arg0: i32) -> (i32, i32, i32) {
    %c0_i32 = arith.constant 0 : i32
    %c0_i32_0 = arith.constant 0 : i32
    %c0_i32_1 = arith.constant 0 : i32
    %c0_i32_2 = arith.constant 0 : i32
    return %c0_i32, %c0_i32_0, %c0_i32_1 : i32, i32, i32
  }
  func.func @transform_2(%arg0: i32) -> (i32, i32) {
    %c0_i32 = arith.constant 0 : i32
    %c0_i32_0 = arith.constant 0 : i32
    %c0_i32_1 = arith.constant 0 : i32
    return %c0_i32, %c0_i32_0 : i32, i32
  }
  func.func @transform_3(%arg0: i32) -> (i32, i32, i32) {
    %c0_i32 = arith.constant 0 : i32
    %c0_i32_0 = arith.constant 0 : i32
    %c0_i32_1 = arith.constant 0 : i32
    return %arg0, %c0_i32, %c0_i32_0 : i32, i32, i32
  }
  func.func @transform_4(%arg0: i32) -> (i32, i32, i32) {
    %c0_i32 = arith.constant 0 : i32
    %c0_i32_0 = arith.constant 0 : i32
    %c0_i32_1 = arith.constant 0 : i32
    return %arg0, %c0_i32, %c0_i32_0 : i32, i32, i32
  }
  func.func @transform_5(%arg0: i32) -> (i32, i32, i32) {
    %c0_i32 = arith.constant 0 : i32
    %c0_i32_0 = arith.constant 0 : i32
    %c0_i32_1 = arith.constant 0 : i32
    return %arg0, %c0_i32, %c0_i32_0 : i32, i32, i32
  }
}

</mosaic_0001>

<llo_original>
// kernel: tpu_custom_call.1
$region0: #{tpu_custom_call.1}
  #allocation0 [shape = 'u32[]', space=smem, size = 0x4, offset = 0x4, fixed_abs, tag = 'smem constant byte address 0x4 - core index']
  #allocation1 [shape = 'u32[72,128]{1,0:T(1,128)}', space=vmem, size = 0x9000, scoped, tag = 'internal scratch']
  %s0 = inlined_call_operand.vmem [shape: bf16[2,4,4,128], index: 0, kind: input, shape index: {}]
  %s1 = inlined_call_operand.vmem [shape: bf16[9,8,4], index: 1, kind: input, shape index: {}]
  %s2 = inlined_call_operand.vmem [shape: f32[1,72], index: 2, kind: input, shape index: {}]
  %s3 = inlined_call_operand.hbm [shape: bf16[2,8,72], index: 3, kind: output, shape index: {0}]
  %s4 = inlined_call_operand.hbm [shape: bf16[2,8,72], index: 4, kind: output, shape index: {1}]
  %s5 = inlined_call_operand.hbm [shape: f32[2,2,8], index: 5, kind: output, shape index: {2}]
  %6 = xla_tuple %s3, %s4, %s5
  %s7 = sld [smem:[#allocation0]]
  $region61: #{tpu_custom_call.1} parent=0
    _
  %s9 = ssub.s32 1, %s7
  %s10 = scalar_select 0, %s9, %s7
  $region1: #{tpu_custom_call.1} parent=0
    #allocation2 [shape = 'u8[4096]{0}', space=vmem, size = 0x1000, scoped, tag = 'output window, operand 0']
    #allocation3 [shape = 's32[2]{0}', space=sflag, size = 0x8, scoped, tag = 'scoped memory for tpu_custom_call.1']
    #allocation4 [shape = 'u8[4096]{0}', space=vmem, size = 0x1000, scoped, tag = 'output window, operand 1']
    #allocation5 [shape = 's32[2]{0}', space=sflag, size = 0x8, scoped, tag = 'scoped memory for tpu_custom_call.1']
    #allocation6 [shape = 'u8[2048]{0}', space=vmem, size = 0x800, scoped, tag = 'output window, operand 2']
    %11 = vsyncpa [#allocation3], 0
    %s12 = scalar_lea.sflag [#allocation3], 1
    %13 = vsyncpa %s12, 0
    %14 = vsyncpa [#allocation5], 0
    %s15 = scalar_lea.sflag [#allocation5], 1
    %16 = vsyncpa %s15, 0
    loop: start=0, step=1, limit=4
    $region2: #{tpu_custom_call.1} parent=1 // loop_pre_header
      _
    $region3: #{tpu_custom_call.1} parent=1 // loop_header
      %s18 = sphi 0, %s22
      %p19 = scmp.ge.s32.totalorder %s18, 4
      %s28 = sphi 0, %s30
      %s31 = sphi 0, %s28
      %s32 = sphi 0, %s31
      %s48 = sphi 0, %s32
      %s52 = sphi 0, %s52
      %s54 = sphi 0, %s52
      %s55 = sphi 0, %s54
      %s69 = sphi 0, %s55
      %s73 = sphi 0, %s73
      %s75 = sphi 0, %s73
      %s76 = sphi 0, %s75
      %s90 = sphi 0, %s76
      %s96 = sphi 0, %s98
      %s99 = sphi 0, %s96
      %s100 = sphi 0, %s99
      %s116 = sphi 0, %s100
      %s122 = sphi 0, %s124
      %s125 = sphi 0, %s122
      %s126 = sphi 0, %s125
      %s142 = sphi 0, %s126
      %s148 = sphi 0, %s150
      %s151 = sphi 0, %s148
      %s152 = sphi 0, %s151
      %s168 = sphi 0, %s152
    $region4: #{tpu_custom_call.1} parent=1 // loop_header_branch
      %21 = sbr.rel (%p19) target = $region8
    $region5: #{tpu_custom_call.1} parent=1 // loop_body
      %s23 = ssub.s32 %s18, 1
      %s24 = ssub.s32 %s18, 2
      %s25 = sadd.s32 %s18, 1
      %s26 = ssub.s32 %s18, %s25
      %p27 = scmp.eq.s32.totalorder %s26, 0
      %s29 = sadd.s32 %s28, 1
      %s30 = scalar_select %p27, %s28, %s29
      %p33 = pneg %p27
      %p34 = scmp.eq.s32.totalorder %s18, 1
      %p35 = por %p33, %p34
      %p36 = scmp.ne.s32.totalorder %s28, %s31
      %p37 = scmp.eq.s32.totalorder %s18, 0
      %p38 = por %p36, %p37
      %p39 = scmp.ne.s32.totalorder %s28, %s31
      %p40 = scmp.eq.s32.totalorder %s23, 1
      %p41 = por %p39, %p40
      %p42 = scmp.ne.s32.totalorder %s31, %s32
      %p43 = scmp.eq.s32.totalorder %s23, 0
      %p44 = por %p42, %p43
      %p45 = scmp.ne.s32.totalorder %s31, %s32
      %p46 = scmp.eq.s32.totalorder %s24, 1
      %p47 = por %p45, %p46
      %p49 = scmp.ne.s32.totalorder %s32, %s48
      %p50 = scmp.eq.s32.totalorder %s24, 0
      %p51 = por %p49, %p50
      %s53 = sadd.s32 %s52, 1
      %p56 = scmp.eq.s32.totalorder %s18, 1
      %p57 = scmp.ne.s32.totalorder %s52, %s54
      %p58 = scmp.eq.s32.totalorder %s18, 0
      %p59 = por %p57, %p58
      %p60 = scmp.ne.s32.totalorder %s52, %s54
      %p61 = scmp.eq.s32.totalorder %s23, 1
      %p62 = por %p60, %p61
      %p63 = scmp.ne.s32.totalorder %s54, %s55
      %p64 = scmp.eq.s32.totalorder %s23, 0
      %p65 = por %p63, %p64
      %p66 = scmp.ne.s32.totalorder %s54, %s55
      %p67 = scmp.eq.s32.totalorder %s24, 1
      %p68 = por %p66, %p67
      %p70 = scmp.ne.s32.totalorder %s55, %s69
      %p71 = scmp.eq.s32.totalorder %s24, 0
      %p72 = por %p70, %p71
      %s74 = sadd.s32 %s73, 1
      %p77 = scmp.eq.s32.totalorder %s18, 1
      %p78 = scmp.ne.s32.totalorder %s73, %s75
      %p79 = scmp.eq.s32.totalorder %s18, 0
      %p80 = por %p78, %p79
      %p81 = scmp.ne.s32.totalorder %s73, %s75
      %p82 = scmp.eq.s32.totalorder %s23, 1
      %p83 = por %p81, %p82
      %p84 = scmp.ne.s32.totalorder %s75, %s76
      %p85 = scmp.eq.s32.totalorder %s23, 0
      %p86 = por %p84, %p85
      %p87 = scmp.ne.s32.totalorder %s75, %s76
      %p88 = scmp.eq.s32.totalorder %s24, 1
      %p89 = por %p87, %p88
      %p91 = scmp.ne.s32.totalorder %s76, %s90
      %p92 = scmp.eq.s32.totalorder %s24, 0
      %p93 = por %p91, %p92
      %s94 = ssub.s32 %s18, %s25
      %p95 = scmp.eq.s32.totalorder %s94, 0
      %s97 = sadd.s32 %s96, 1
      %s98 = scalar_select %p95, %s96, %s97
      %p101 = pneg %p95
      %p102 = scmp.eq.s32.totalorder %s18, 1
      %p103 = por %p101, %p102
      %p104 = scmp.ne.s32.totalorder %s96, %s99
      %p105 = scmp.eq.s32.totalorder %s18, 0
      %p106 = por %p104, %p105
      %p107 = scmp.ne.s32.totalorder %s96, %s99
      %p108 = scmp.eq.s32.totalorder %s23, 1
      %p109 = por %p107, %p108
      %p110 = scmp.ne.s32.totalorder %s99, %s100
      %p111 = scmp.eq.s32.totalorder %s23, 0
      %p112 = por %p110, %p111
      %p113 = scmp.ne.s32.totalorder %s99, %s100
      %p114 = scmp.eq.s32.totalorder %s24, 1
      %p115 = por %p113, %p114
      %p117 = scmp.ne.s32.totalorder %s100, %s116
      %p118 = scmp.eq.s32.totalorder %s24, 0
      %p119 = por %p117, %p118
      %s120 = ssub.s32 %s18, %s25
      %p121 = scmp.eq.s32.totalorder %s120, 0
      %s123 = sadd.s32 %s122, 1
      %s124 = scalar_select %p121, %s122, %s123
      %p127 = pneg %p121
      %p128 = scmp.eq.s32.totalorder %s18, 1
      %p129 = por %p127, %p128
      %p130 = scmp.ne.s32.totalorder %s122, %s125
      %p131 = scmp.eq.s32.totalorder %s18, 0
      %p132 = por %p130, %p131
      %p133 = scmp.ne.s32.totalorder %s122, %s125
      %p134 = scmp.eq.s32.totalorder %s23, 1
      %p135 = por %p133, %p134
      %p136 = scmp.ne.s32.totalorder %s125, %s126
      %p137 = scmp.eq.s32.totalorder %s23, 0
      %p138 = por %p136, %p137
      %p139 = scmp.ne.s32.totalorder %s125, %s126
      %p140 = scmp.eq.s32.totalorder %s24, 1
      %p141 = por %p139, %p140
      %p143 = scmp.ne.s32.totalorder %s126, %s142
      %p144 = scmp.eq.s32.totalorder %s24, 0
      %p145 = por %p143, %p144
      %s146 = ssub.s32 %s18, %s25
      %p147 = scmp.eq.s32.totalorder %s146, 0
      %s149 = sadd.s32 %s148, 1
      %s150 = scalar_select %p147, %s148, %s149
      %p153 = pneg %p147
      %p154 = scmp.eq.s32.totalorder %s18, 1
      %p155 = por %p153, %p154
      %p156 = scmp.ne.s32.totalorder %s148, %s151
      %p157 = scmp.eq.s32.totalorder %s18, 0
      %p158 = por %p156, %p157
      %p159 = scmp.ne.s32.totalorder %s148, %s151
      %p160 = scmp.eq.s32.totalorder %s23, 1
      %p161 = por %p159, %p160
      %p162 = scmp.ne.s32.totalorder %s151, %s152
      %p163 = scmp.eq.s32.totalorder %s23, 0
      %p164 = por %p162, %p163
      %p165 = scmp.ne.s32.totalorder %s151, %s152
      %p166 = scmp.eq.s32.totalorder %s24, 1
      %p167 = por %p165, %p166
      %p169 = scmp.ne.s32.totalorder %s152, %s168
      %p170 = scmp.eq.s32.totalorder %s24, 0
      %p171 = por %p169, %p170
      %p172 = scmp.le.s32.totalorder 1, %s18
      %p173 = scmp.lt.s32.totalorder %s18, 3
      %p174 = pnand %p172, %p173
      %p175 = pneg %p174
      // Predicated region
      $region9: #{tpu_custom_call.1} parent=5 // pred_check
        _
      $region10: #{tpu_custom_call.1} parent=5 // pred_check_branch
        %177 = sbr.rel (%p174) target = $region12
      $region11: #{tpu_custom_call.1} parent=5 // pred_region
        %s178 = ssub.s32 %s18, 1
        // Predicated region
        $region13: #{tpu_custom_call.1} parent=11 // pred_check
          %p179 = pneg %p65
        $region14: #{tpu_custom_call.1} parent=11 // pred_check_branch
          %181 = sbr.rel (%p179) target = $region16
        $region15: #{tpu_custom_call.1} parent=11 // pred_region
          _
        $region16: #{tpu_custom_call.1} parent=11 // pred_fallthru
          _
        // Predicated region
        $region17: #{tpu_custom_call.1} parent=11 // pred_check
          %p182 = pneg %p86
        $region18: #{tpu_custom_call.1} parent=11 // pred_check_branch
          %184 = sbr.rel (%p182) target = $region20
        $region19: #{tpu_custom_call.1} parent=11 // pred_region
          _
        $region20: #{tpu_custom_call.1} parent=11 // pred_fallthru
          _
      $region12: #{tpu_custom_call.1} parent=5 // pred_fallthru
        _
      %p185 = scmp.lt.s32.totalorder %s18, 2
      // Predicated region
      $region21: #{tpu_custom_call.1} parent=5 // pred_check
        %p186 = pneg %p185
      $region22: #{tpu_custom_call.1} parent=5 // pred_check_branch
        %188 = sbr.rel (%p186) target = $region24
      $region23: #{tpu_custom_call.1} parent=5 // pred_region
        // Predicated region
        $region25: #{tpu_custom_call.1} parent=23 // pred_check
          %p189 = pneg %p38
        $region26: #{tpu_custom_call.1} parent=23 // pred_check_branch
          %191 = sbr.rel (%p189) target = $region28
        $region27: #{tpu_custom_call.1} parent=23 // pred_region
          %p192 = scmp.lt.s32.totalorder %s18, 1
          %s193 = scalar_select %p192, %s18, 1
          %s194 = smul.addr %s193, 4
          %s195 = smul.addr %s194, 2
          %s196 = scalar_lea.vmem %s0, %s195
        $region28: #{tpu_custom_call.1} parent=23 // pred_fallthru
          _
      $region24: #{tpu_custom_call.1} parent=5 // pred_fallthru
        _
      %p197 = scmp.le.s32.totalorder 1, %s18
      %p198 = scmp.lt.s32.totalorder %s18, 3
      %p199 = pnand %p197, %p198
      %p200 = pneg %p199
      // Predicated region
      $region29: #{tpu_custom_call.1} parent=5 // pred_check
        _
      $region30: #{tpu_custom_call.1} parent=5 // pred_check_branch
        %202 = sbr.rel (%p199) target = $region32
      $region31: #{tpu_custom_call.1} parent=5 // pred_region
        %s203 = ssub.s32 %s18, 1
        %p204 = scmp.lt.s32.totalorder %s23, 1
        %s205 = scalar_select %p204, %s23, 1
        %s206 = smul.addr %s205, 4
        %s207 = smul.addr %s206, 2
        %s208 = scalar_lea.vmem %s0, %s207
        %p209 = pneg %p44
        %p210 = pneg %p41
        %p211 = pneg %p65
        %p212 = pneg %p62
        %p213 = pneg %p86
        %p214 = pneg %p83
        %p215 = pneg %p112
        %p216 = pneg %p109
        %s217 = sand.u32 %s99, 1
        %s218 = scalar_lea.sflag [#allocation3], %s217
        %s219 = sand.u32 %s99, 1
        %s220 = smul.addr %s219, 4
        %s221 = scalar_lea.vmem [#allocation2], %s220
        %p222 = pneg %p138
        %p223 = pneg %p135
        %s224 = sand.u32 %s23, 1
        %s225 = scalar_lea.sflag [#allocation5], %s224
        %s226 = sand.u32 %s125, 1
        %s227 = smul.addr %s226, 4
        %s228 = scalar_lea.vmem [#allocation4], %s227
        %p229 = pneg %p164
        %p230 = pneg %p161
        %s231 = sand.u32 %s23, 1
        %s232 = scalar_lea.sflag [#allocation5], %s231
        %s233 = sand.u32 %s151, 1
        %s234 = smul.addr %s233, 2
        %s235 = scalar_lea.vmem [#allocation6], %s234
        %p236 = scmp.lt.s32.totalorder %s23, 1
        %s237 = scalar_select %p236, %s23, 1
        %s238 = smul.addr %s237, 4
        %s239 = smul.addr %s238, 2
        %s240 = scalar_lea.vmem %s0, %s239
        %v242 = vld [vmem:[%s240] sm:$0x3]
        %v243 = vld [vmem:[%s240 + $0x2] sm:$0x3]
        %v244 = vld [vmem:[%s240 + $0x4] sm:$0x3]
        %v245 = vld [vmem:[%s240 + $0x6] sm:$0x3]
        %v246 = vld [vmem:[%s1] sm:$0xf]
        %v247 = vld [vmem:[%s1 + $0x4] sm:$0xf]
        %v248 = vld [vmem:[%s1 + $0x8] sm:$0xf]
        %v249 = vld [vmem:[%s1 + $0xc] sm:$0xf]
        %v250 = vld [vmem:[%s1 + $0x10] sm:$0xf]
        %v251 = vld [vmem:[%s1 + $0x14] sm:$0xf]
        %v252 = vld [vmem:[%s1 + $0x18] sm:$0xf]
        %v253 = vld [vmem:[%s1 + $0x1c] sm:$0xf]
        %v254 = vld [vmem:[%s1 + $0x20] sm:$0xf]
        %v255 = vld [vmem:[%s2] sm:$0x1]
        %vm256 = vcmask 31744
        %v258 = vsel %vm256, %v247, 0
        %vm260 = vcmask 1041408
        %v262 = vsel %vm260, %v243, 0
        %264 = vmatpush.bf16.msra.mxu0 0
        %265 = vmatpush.bf16.msra.mxu0 0
        %266 = vmatpush.bf16.msra.mxu0 0
        %267 = vmatpush.bf16.msra.mxu0 0
        %268 = vmatpush.bf16.msra.mxu0 0
        %269 = vmatpush.bf16.msra.mxu0 0
        %270 = vmatpush.bf16.msra.mxu0 0
        %271 = vmatpush.bf16.msra.mxu0 %v262
        %272 = vmatmul.bf16.gmra.mxu0 %v258
        %v273 = vpop.f32.mrf.mxu0
        %v274 = vadd.f32 0.0, %v273
        %v275 = vpop.f32.mrf.mxu0
        %276 = vdwg.mxu0
        %v278 = vsel %vm256, %v246, 0
        %v281 = vsel %vm260, %v242, 0
        %283 = vmatpush.bf16.msra.mxu0 0
        %284 = vmatpush.bf16.msra.mxu0 0
        %285 = vmatpush.bf16.msra.mxu0 0
        %286 = vmatpush.bf16.msra.mxu0 0
        %287 = vmatpush.bf16.msra.mxu0 0
        %288 = vmatpush.bf16.msra.mxu0 0
        %289 = vmatpush.bf16.msra.mxu0 0
        %290 = vmatpush.bf16.msra.mxu0 %v281
        %291 = vmatmul.bf16.gmra.mxu0 %v278
        %v292 = vpop.f32.mrf.mxu0
        %v293 = vadd.f32 %v274, %v292
        %v294 = vpop.f32.mrf.mxu0
        %295 = vdwg.mxu0
        %296 = vst [vmem:[#allocation1] ss:$4 sm:$0xff] %v242
        %v297 = vld.sshfl [vmem:[#allocation1] sm:$0xff pattern:$0x73625140]
        %299 = vrot.lane.b32.xlu0 %v297, 127
        %v300 = vpop.permute.xlu0 %299
        %v302 = vsel %vm256, %v248, 0
        %v305 = vsel %vm260, %v300, 0
        %307 = vmatpush.bf16.msra.mxu0 0
        %308 = vmatpush.bf16.msra.mxu0 0
        %309 = vmatpush.bf16.msra.mxu0 0
        %310 = vmatpush.bf16.msra.mxu0 0
        %311 = vmatpush.bf16.msra.mxu0 0
        %312 = vmatpush.bf16.msra.mxu0 0
        %313 = vmatpush.bf16.msra.mxu0 0
        %314 = vmatpush.bf16.msra.mxu0 %v305
        %315 = vmatmul.bf16.gmra.mxu0 %v302
        %v316 = vpop.f32.mrf.mxu0
        %v317 = vadd.f32 0.0, %v316
        %v318 = vpop.f32.mrf.mxu0
        %319 = vdwg.mxu0
        %v320 = vadd.f32 %v293, %v317
        %v322 = vsel %vm256, %v249, 0
        %v325 = vsel %vm260, %v244, 0
        %327 = vmatpush.bf16.msra.mxu0 0
        %328 = vmatpush.bf16.msra.mxu0 0
        %329 = vmatpush.bf16.msra.mxu0 0
        %330 = vmatpush.bf16.msra.mxu0 0
        %331 = vmatpush.bf16.msra.mxu0 0
        %332 = vmatpush.bf16.msra.mxu0 0
        %333 = vmatpush.bf16.msra.mxu0 0
        %334 = vmatpush.bf16.msra.mxu0 %v325
        %335 = vmatmul.bf16.gmra.mxu0 %v322
        %v336 = vpop.f32.mrf.mxu0
        %v337 = vadd.f32 0.0, %v336
        %v338 = vpop.f32.mrf.mxu0
        %339 = vdwg.mxu0
        %v340 = vadd.f32 %v320, %v337
        %v342 = vsel %vm256, %v250, 0
        %v345 = vsel %vm260, %v245, 0
        %347 = vmatpush.bf16.msra.mxu0 0
        %348 = vmatpush.bf16.msra.mxu0 0
        %349 = vmatpush.bf16.msra.mxu0 0
        %350 = vmatpush.bf16.msra.mxu0 0
        %351 = vmatpush.bf16.msra.mxu0 0
        %352 = vmatpush.bf16.msra.mxu0 0
        %353 = vmatpush.bf16.msra.mxu0 0
        %354 = vmatpush.bf16.msra.mxu0 %v345
        %355 = vmatmul.bf16.gmra.mxu0 %v342
        %v356 = vpop.f32.mrf.mxu0
        %v357 = vadd.f32 0.0, %v356
        %v358 = vpop.f32.mrf.mxu0
        %359 = vdwg.mxu0
        %v360 = vadd.f32 %v340, %v357
        %361 = vst [vmem:[#allocation1] ss:$4 sm:$0xff] %v244
        %v362 = vld.sshfl [vmem:[#allocation1] sm:$0xff pattern:$0x73625140]
        %364 = vrot.lane.b32.xlu0 %v362, 127
        %v365 = vpop.permute.xlu0 %364
        %v367 = vsel %vm256, %v251, 0
        %v370 = vsel %vm260, %v365, 0
        %372 = vmatpush.bf16.msra.mxu0 0
        %373 = vmatpush.bf16.msra.mxu0 0
        %374 = vmatpush.bf16.msra.mxu0 0
        %375 = vmatpush.bf16.msra.mxu0 0
        %376 = vmatpush.bf16.msra.mxu0 0
        %377 = vmatpush.bf16.msra.mxu0 0
        %378 = vmatpush.bf16.msra.mxu0 0
        %379 = vmatpush.bf16.msra.mxu0 %v370
        %380 = vmatmul.bf16.gmra.mxu0 %v367
        %v381 = vpop.f32.mrf.mxu0
        %v382 = vadd.f32 0.0, %v381
        %v383 = vpop.f32.mrf.mxu0
        %384 = vdwg.mxu0
        %v385 = vadd.f32 %v360, %v382
        %386 = vst [vmem:[#allocation1] ss:$4 sm:$0xff] %v242
        %v387 = vld.sshfl [vmem:[#allocation1] sm:$0xff pattern:$0x73625140]
        %389 = vrot.lane.b32.xlu0 %v387, 119
        %v390 = vpop.permute.xlu0 %389
        %v392 = vsel %vm256, %v252, 0
        %v395 = vsel %vm260, %v390, 0
        %397 = vmatpush.bf16.msra.mxu0 0
        %398 = vmatpush.bf16.msra.mxu0 0
        %399 = vmatpush.bf16.msra.mxu0 0
        %400 = vmatpush.bf16.msra.mxu0 0
        %401 = vmatpush.bf16.msra.mxu0 0
        %402 = vmatpush.bf16.msra.mxu0 0
        %403 = vmatpush.bf16.msra.mxu0 0
        %404 = vmatpush.bf16.msra.mxu0 %v395
        %405 = vmatmul.bf16.gmra.mxu0 %v392
        %v406 = vpop.f32.mrf.mxu0
        %v407 = vadd.f32 0.0, %v406
        %v408 = vpop.f32.mrf.mxu0
        %409 = vdwg.mxu0
        %v410 = vadd.f32 %v385, %v407
        %411 = vst [vmem:[#allocation1] ss:$4 sm:$0xff] %v243
        %v412 = vld.sshfl [vmem:[#allocation1] sm:$0xff pattern:$0x73625140]
        %414 = vrot.lane.b32.xlu0 %v412, 119
        %v415 = vpop.permute.xlu0 %414
        %v417 = vsel %vm256, %v253, 0
        %v420 = vsel %vm260, %v415, 0
        %422 = vmatpush.bf16.msra.mxu0 0
        %423 = vmatpush.bf16.msra.mxu0 0
        %424 = vmatpush.bf16.msra.mxu0 0
        %425 = vmatpush.bf16.msra.mxu0 0
        %426 = vmatpush.bf16.msra.mxu0 0
        %427 = vmatpush.bf16.msra.mxu0 0
        %428 = vmatpush.bf16.msra.mxu0 0
        %429 = vmatpush.bf16.msra.mxu0 %v420
        %430 = vmatmul.bf16.gmra.mxu0 %v417
        %v431 = vpop.f32.mrf.mxu0
        %v432 = vadd.f32 0.0, %v431
        %v433 = vpop.f32.mrf.mxu0
        %434 = vdwg.mxu0
        %v435 = vadd.f32 %v410, %v432
        %436 = vst [vmem:[#allocation1] ss:$4 sm:$0xff] %v242
        %v437 = vld.sshfl [vmem:[#allocation1] sm:$0xff pattern:$0x73625140]
        %439 = vrot.lane.b32.xlu0 %v437, 118
        %v440 = vpop.permute.xlu0 %439
        %v442 = vsel %vm256, %v254, 0
        %v445 = vsel %vm260, %v440, 0
        %447 = vmatpush.bf16.msra.mxu0 0
        %448 = vmatpush.bf16.msra.mxu0 0
        %449 = vmatpush.bf16.msra.mxu0 0
        %450 = vmatpush.bf16.msra.mxu0 0
        %451 = vmatpush.bf16.msra.mxu0 0
        %452 = vmatpush.bf16.msra.mxu0 0
        %453 = vmatpush.bf16.msra.mxu0 0
        %454 = vmatpush.bf16.msra.mxu0 %v445
        %455 = vmatmul.bf16.gmra.mxu0 %v442
        %v456 = vpop.f32.mrf.mxu0
        %v457 = vadd.f32 0.0, %v456
        %v458 = vpop.f32.mrf.mxu0
        %459 = vdwg.mxu0
        %v460 = vadd.f32 %v435, %v457
        %461 = vst [vmem:[#allocation1] ss:$4 sm:$0xff] %v242
        %v462 = vld.sshfl [vmem:[#allocation1] sm:$0xff pattern:$0x73625140]
        %464 = vrot.lane.b32.xlu0 %v462, 127
        %v465 = vpop.permute.xlu0 %464
        %v467 = vsel %vm260, %v465, 0
        %469 = vmatpush.bf16.msra.mxu0 0
        %470 = vmatpush.bf16.msra.mxu0 0
        %471 = vmatpush.bf16.msra.mxu0 0
        %472 = vmatpush.bf16.msra.mxu0 0
        %473 = vmatpush.bf16.msra.mxu0 0
        %474 = vmatpush.bf16.msra.mxu0 0
        %475 = vmatpush.bf16.msra.mxu0 0
        %476 = vmatpush.bf16.msra.mxu0 %v467
        %477 = vmatmul.bf16.gmra.mxu0 %v258
        %v478 = vpop.f32.mrf.mxu0
        %v479 = vadd.f32 0.0, %v478
        %v480 = vpop.f32.mrf.mxu0
        %481 = vdwg.mxu0
        %482 = vmatpush.bf16.msra.mxu0 0
        %483 = vmatpush.bf16.msra.mxu0 0
        %484 = vmatpush.bf16.msra.mxu0 0
        %485 = vmatpush.bf16.msra.mxu0 0
        %486 = vmatpush.bf16.msra.mxu0 0
        %487 = vmatpush.bf16.msra.mxu0 0
        %488 = vmatpush.bf16.msra.mxu0 0
        %489 = vmatpush.bf16.msra.mxu0 %v262
        %490 = vmatmul.bf16.gmra.mxu0 %v278
        %v491 = vpop.f32.mrf.mxu0
        %v492 = vadd.f32 %v479, %v491
        %v493 = vpop.f32.mrf.mxu0
        %494 = vdwg.mxu0
        %495 = vst [vmem:[#allocation1] ss:$4 sm:$0xff] %v243
        %v496 = vld.sshfl [vmem:[#allocation1] sm:$0xff pattern:$0x73625140]
        %498 = vrot.lane.b32.xlu0 %v496, 127
        %v499 = vpop.permute.xlu0 %498
        %v501 = vsel %vm260, %v499, 0
        %503 = vmatpush.bf16.msra.mxu0 0
        %504 = vmatpush.bf16.msra.mxu0 0
        %505 = vmatpush.bf16.msra.mxu0 0
        %506 = vmatpush.bf16.msra.mxu0 0
        %507 = vmatpush.bf16.msra.mxu0 0
        %508 = vmatpush.bf16.msra.mxu0 0
        %509 = vmatpush.bf16.msra.mxu0 0
        %510 = vmatpush.bf16.msra.mxu0 %v501
        %511 = vmatmul.bf16.gmra.mxu0 %v302
        %v512 = vpop.f32.mrf.mxu0
        %v513 = vadd.f32 0.0, %v512
        %v514 = vpop.f32.mrf.mxu0
        %515 = vdwg.mxu0
        %v516 = vadd.f32 %v492, %v513
        %517 = vmatpush.bf16.msra.mxu0 0
        %518 = vmatpush.bf16.msra.mxu0 0
        %519 = vmatpush.bf16.msra.mxu0 0
        %520 = vmatpush.bf16.msra.mxu0 0
        %521 = vmatpush.bf16.msra.mxu0 0
        %522 = vmatpush.bf16.msra.mxu0 0
        %523 = vmatpush.bf16.msra.mxu0 0
        %524 = vmatpush.bf16.msra.mxu0 %v345
        %525 = vmatmul.bf16.gmra.mxu0 %v322
        %v526 = vpop.f32.mrf.mxu0
        %v527 = vadd.f32 0.0, %v526
        %v528 = vpop.f32.mrf.mxu0
        %529 = vdwg.mxu0
        %v530 = vadd.f32 %v516, %v527
        %531 = vst [vmem:[#allocation1] ss:$4 sm:$0xff] %v244
        %v532 = vld.sshfl [vmem:[#allocation1] sm:$0xff pattern:$0x73625140]
        %534 = vrot.lane.b32.xlu0 %v532, 127
        %v535 = vpop.permute.xlu0 %534
        %v537 = vsel %vm260, %v535, 0
        %539 = vmatpush.bf16.msra.mxu0 0
        %540 = vmatpush.bf16.msra.mxu0 0
        %541 = vmatpush.bf16.msra.mxu0 0
        %542 = vmatpush.bf16.msra.mxu0 0
        %543 = vmatpush.bf16.msra.mxu0 0
        %544 = vmatpush.bf16.msra.mxu0 0
        %545 = vmatpush.bf16.msra.mxu0 0
        %546 = vmatpush.bf16.msra.mxu0 %v537
        %547 = vmatmul.bf16.gmra.mxu0 %v342
        %v548 = vpop.f32.mrf.mxu0
        %v549 = vadd.f32 0.0, %v548
        %v550 = vpop.f32.mrf.mxu0
        %551 = vdwg.mxu0
        %v552 = vadd.f32 %v530, %v549
        %553 = vst [vmem:[#allocation1] ss:$4 sm:$0xff] %v245
        %v554 = vld.sshfl [vmem:[#allocation1] sm:$0xff pattern:$0x73625140]
        %556 = vrot.lane.b32.xlu0 %v554, 127
        %v557 = vpop.permute.xlu0 %556
        %v559 = vsel %vm260, %v557, 0
        %561 = vmatpush.bf16.msra.mxu0 0
        %562 = vmatpush.bf16.msra.mxu0 0
        %563 = vmatpush.bf16.msra.mxu0 0
        %564 = vmatpush.bf16.msra.mxu0 0
        %565 = vmatpush.bf16.msra.mxu0 0
        %566 = vmatpush.bf16.msra.mxu0 0
        %567 = vmatpush.bf16.msra.mxu0 0
        %568 = vmatpush.bf16.msra.mxu0 %v559
        %569 = vmatmul.bf16.gmra.mxu0 %v367
        %v570 = vpop.f32.mrf.mxu0
        %v571 = vadd.f32 0.0, %v570
        %v572 = vpop.f32.mrf.mxu0
        %573 = vdwg.mxu0
        %v574 = vadd.f32 %v552, %v571
        %575 = vst [vmem:[#allocation1] ss:$4 sm:$0xff] %v243
        %v576 = vld.sshfl [vmem:[#allocation1] sm:$0xff pattern:$0x73625140]
        %578 = vrot.lane.b32.xlu0 %v576, 119
        %v579 = vpop.permute.xlu0 %578
        %v581 = vsel %vm260, %v579, 0
        %583 = vmatpush.bf16.msra.mxu0 0
        %584 = vmatpush.bf16.msra.mxu0 0
        %585 = vmatpush.bf16.msra.mxu0 0
        %586 = vmatpush.bf16.msra.mxu0 0
        %587 = vmatpush.bf16.msra.mxu0 0
        %588 = vmatpush.bf16.msra.mxu0 0
        %589 = vmatpush.bf16.msra.mxu0 0
        %590 = vmatpush.bf16.msra.mxu0 %v581
        %591 = vmatmul.bf16.gmra.mxu0 %v392
        %v592 = vpop.f32.mrf.mxu0
        %v593 = vadd.f32 0.0, %v592
        %v594 = vpop.f32.mrf.mxu0
        %595 = vdwg.mxu0
        %v596 = vadd.f32 %v574, %v593
        %597 = vst [vmem:[#allocation1] ss:$4 sm:$0xff] %v242
        %v598 = vld.sshfl [vmem:[#allocation1] sm:$0xff pattern:$0x73625140]
        %600 = vrot.lane.b32.xlu0 %v598, 118
        %v601 = vpop.permute.xlu0 %600
        %v603 = vsel %vm260, %v601, 0
        %605 = vmatpush.bf16.msra.mxu0 0
        %606 = vmatpush.bf16.msra.mxu0 0
        %607 = vmatpush.bf16.msra.mxu0 0
        %608 = vmatpush.bf16.msra.mxu0 0
        %609 = vmatpush.bf16.msra.mxu0 0
        %610 = vmatpush.bf16.msra.mxu0 0
        %611 = vmatpush.bf16.msra.mxu0 0
        %612 = vmatpush.bf16.msra.mxu0 %v603
        %613 = vmatmul.bf16.gmra.mxu0 %v417
        %v614 = vpop.f32.mrf.mxu0
        %v615 = vadd.f32 0.0, %v614
        %v616 = vpop.f32.mrf.mxu0
        %617 = vdwg.mxu0
        %v618 = vadd.f32 %v596, %v615
        %619 = vst [vmem:[#allocation1] ss:$4 sm:$0xff] %v243
        %v620 = vld.sshfl [vmem:[#allocation1] sm:$0xff pattern:$0x73625140]
        %622 = vrot.lane.b32.xlu0 %v620, 118
        %v623 = vpop.permute.xlu0 %622
        %v625 = vsel %vm260, %v623, 0
        %627 = vmatpush.bf16.msra.mxu0 0
        %628 = vmatpush.bf16.msra.mxu0 0
        %629 = vmatpush.bf16.msra.mxu0 0
        %630 = vmatpush.bf16.msra.mxu0 0
        %631 = vmatpush.bf16.msra.mxu0 0
        %632 = vmatpush.bf16.msra.mxu0 0
        %633 = vmatpush.bf16.msra.mxu0 0
        %634 = vmatpush.bf16.msra.mxu0 %v625
        %635 = vmatmul.bf16.gmra.mxu0 %v442
        %v636 = vpop.f32.mrf.mxu0
        %v637 = vadd.f32 0.0, %v636
        %v638 = vpop.f32.mrf.mxu0
        %639 = vdwg.mxu0
        %v640 = vadd.f32 %v618, %v637
        %641 = vmatpush.bf16.msra.mxu0 0
        %642 = vmatpush.bf16.msra.mxu0 0
        %643 = vmatpush.bf16.msra.mxu0 0
        %644 = vmatpush.bf16.msra.mxu0 0
        %645 = vmatpush.bf16.msra.mxu0 0
        %646 = vmatpush.bf16.msra.mxu0 0
        %647 = vmatpush.bf16.msra.mxu0 0
        %648 = vmatpush.bf16.msra.mxu0 %v345
        %649 = vmatmul.bf16.gmra.mxu0 %v258
        %v650 = vpop.f32.mrf.mxu0
        %v651 = vadd.f32 0.0, %v650
        %v652 = vpop.f32.mrf.mxu0
        %653 = vdwg.mxu0
        %654 = vmatpush.bf16.msra.mxu0 0
        %655 = vmatpush.bf16.msra.mxu0 0
        %656 = vmatpush.bf16.msra.mxu0 0
        %657 = vmatpush.bf16.msra.mxu0 0
        %658 = vmatpush.bf16.msra.mxu0 0
        %659 = vmatpush.bf16.msra.mxu0 0
        %660 = vmatpush.bf16.msra.mxu0 0
        %661 = vmatpush.bf16.msra.mxu0 %v325
        %662 = vmatmul.bf16.gmra.mxu0 %v278
        %v663 = vpop.f32.mrf.mxu0
        %v664 = vadd.f32 %v651, %v663
        %v665 = vpop.f32.mrf.mxu0
        %666 = vdwg.mxu0
        %667 = vst [vmem:[#allocation1] ss:$4 sm:$0xff] %v244
        %v668 = vld.sshfl [vmem:[#allocation1] sm:$0xff pattern:$0x73625140]
        %670 = vrot.lane.b32.xlu0 %v668, 127
        %v671 = vpop.permute.xlu0 %670
        %v673 = vsel %vm260, %v671, 0
        %675 = vmatpush.bf16.msra.mxu0 0
        %676 = vmatpush.bf16.msra.mxu0 0
        %677 = vmatpush.bf16.msra.mxu0 0
        %678 = vmatpush.bf16.msra.mxu0 0
        %679 = vmatpush.bf16.msra.mxu0 0
        %680 = vmatpush.bf16.msra.mxu0 0
        %681 = vmatpush.bf16.msra.mxu0 0
        %682 = vmatpush.bf16.msra.mxu0 %v673
        %683 = vmatmul.bf16.gmra.mxu0 %v302
        %v684 = vpop.f32.mrf.mxu0
        %v685 = vadd.f32 0.0, %v684
        %v686 = vpop.f32.mrf.mxu0
        %687 = vdwg.mxu0
        %v688 = vadd.f32 %v664, %v685
        %689 = vst [vmem:[#allocation1] ss:$4 sm:$0xff] %v242
        %v690 = vld.sshfl [vmem:[#allocation1] sm:$0xff pattern:$0x73625140]
        %692 = vrot.lane.b32.xlu0 %v690, 119
        %v693 = vpop.permute.xlu0 %692
        %v695 = vsel %vm260, %v693, 0
        %697 = vmatpush.bf16.msra.mxu0 0
        %698 = vmatpush.bf16.msra.mxu0 0
        %699 = vmatpush.bf16.msra.mxu0 0
        %700 = vmatpush.bf16.msra.mxu0 0
        %701 = vmatpush.bf16.msra.mxu0 0
        %702 = vmatpush.bf16.msra.mxu0 0
        %703 = vmatpush.bf16.msra.mxu0 0
        %704 = vmatpush.bf16.msra.mxu0 %v695
        %705 = vmatmul.bf16.gmra.mxu0 %v322
        %v706 = vpop.f32.mrf.mxu0
        %v707 = vadd.f32 0.0, %v706
        %v708 = vpop.f32.mrf.mxu0
        %709 = vdwg.mxu0
        %v710 = vadd.f32 %v688, %v707
        %711 = vst [vmem:[#allocation1] ss:$4 sm:$0xff] %v243
        %v712 = vld.sshfl [vmem:[#allocation1] sm:$0xff pattern:$0x73625140]
        %714 = vrot.lane.b32.xlu0 %v712, 119
        %v715 = vpop.permute.xlu0 %714
        %v717 = vsel %vm260, %v715, 0
        %719 = vmatpush.bf16.msra.mxu0 0
        %720 = vmatpush.bf16.msra.mxu0 0
        %721 = vmatpush.bf16.msra.mxu0 0
        %722 = vmatpush.bf16.msra.mxu0 0
        %723 = vmatpush.bf16.msra.mxu0 0
        %724 = vmatpush.bf16.msra.mxu0 0
        %725 = vmatpush.bf16.msra.mxu0 0
        %726 = vmatpush.bf16.msra.mxu0 %v717
        %727 = vmatmul.bf16.gmra.mxu0 %v342
        %v728 = vpop.f32.mrf.mxu0
        %v729 = vadd.f32 0.0, %v728
        %v730 = vpop.f32.mrf.mxu0
        %731 = vdwg.mxu0
        %v732 = vadd.f32 %v710, %v729
        %733 = vst [vmem:[#allocation1] ss:$4 sm:$0xff] %v242
        %v734 = vld.sshfl [vmem:[#allocation1] sm:$0xff pattern:$0x73625140]
        %736 = vrot.lane.b32.xlu0 %v734, 118
        %v737 = vpop.permute.xlu0 %736
        %v739 = vsel %vm260, %v737, 0
        %741 = vmatpush.bf16.msra.mxu0 0
        %742 = vmatpush.bf16.msra.mxu0 0
        %743 = vmatpush.bf16.msra.mxu0 0
        %744 = vmatpush.bf16.msra.mxu0 0
        %745 = vmatpush.bf16.msra.mxu0 0
        %746 = vmatpush.bf16.msra.mxu0 0
        %747 = vmatpush.bf16.msra.mxu0 0
        %748 = vmatpush.bf16.msra.mxu0 %v739
        %749 = vmatmul.bf16.gmra.mxu0 %v367
        %v750 = vpop.f32.mrf.mxu0
        %v751 = vadd.f32 0.0, %v750
        %v752 = vpop.f32.mrf.mxu0
        %753 = vdwg.mxu0
        %v754 = vadd.f32 %v732, %v751
        %755 = vst [vmem:[#allocation1] ss:$4 sm:$0xff] %v244
        %v756 = vld.sshfl [vmem:[#allocation1] sm:$0xff pattern:$0x73625140]
        %758 = vrot.lane.b32.xlu0 %v756, 119
        %v759 = vpop.permute.xlu0 %758
        %v761 = vsel %vm260, %v759, 0
        %763 = vmatpush.bf16.msra.mxu0 0
        %764 = vmatpush.bf16.msra.mxu0 0
        %765 = vmatpush.bf16.msra.mxu0 0
        %766 = vmatpush.bf16.msra.mxu0 0
        %767 = vmatpush.bf16.msra.mxu0 0
        %768 = vmatpush.bf16.msra.mxu0 0
        %769 = vmatpush.bf16.msra.mxu0 0
        %770 = vmatpush.bf16.msra.mxu0 %v761
        %771 = vmatmul.bf16.gmra.mxu0 %v392
        %v772 = vpop.f32.mrf.mxu0
        %v773 = vadd.f32 0.0, %v772
        %v774 = vpop.f32.mrf.mxu0
        %775 = vdwg.mxu0
        %v776 = vadd.f32 %v754, %v773
        %777 = vst [vmem:[#allocation1] ss:$4 sm:$0xff] %v245
        %v778 = vld.sshfl [vmem:[#allocation1] sm:$0xff pattern:$0x73625140]
        %780 = vrot.lane.b32.xlu0 %v778, 119
        %v781 = vpop.permute.xlu0 %780
        %v783 = vsel %vm260, %v781, 0
        %785 = vmatpush.bf16.msra.mxu0 0
        %786 = vmatpush.bf16.msra.mxu0 0
        %787 = vmatpush.bf16.msra.mxu0 0
        %788 = vmatpush.bf16.msra.mxu0 0
        %789 = vmatpush.bf16.msra.mxu0 0
        %790 = vmatpush.bf16.msra.mxu0 0
        %791 = vmatpush.bf16.msra.mxu0 0
        %792 = vmatpush.bf16.msra.mxu0 %v783
        %793 = vmatmul.bf16.gmra.mxu0 %v417
        %v794 = vpop.f32.mrf.mxu0
        %v795 = vadd.f32 0.0, %v794
        %v796 = vpop.f32.mrf.mxu0
        %797 = vdwg.mxu0
        %v798 = vadd.f32 %v776, %v795
        %799 = vst [vmem:[#allocation1] ss:$4 sm:$0xff] %v244
        %v800 = vld.sshfl [vmem:[#allocation1] sm:$0xff pattern:$0x73625140]
        %802 = vrot.lane.b32.xlu0 %v800, 118
        %v803 = vpop.permute.xlu0 %802
        %v805 = vsel %vm260, %v803, 0
        %807 = vmatpush.bf16.msra.mxu0 0
        %808 = vmatpush.bf16.msra.mxu0 0
        %809 = vmatpush.bf16.msra.mxu0 0
        %810 = vmatpush.bf16.msra.mxu0 0
        %811 = vmatpush.bf16.msra.mxu0 0
        %812 = vmatpush.bf16.msra.mxu0 0
        %813 = vmatpush.bf16.msra.mxu0 0
        %814 = vmatpush.bf16.msra.mxu0 %v805
        %815 = vmatmul.bf16.gmra.mxu0 %v442
        %v816 = vpop.f32.mrf.mxu0
        %v817 = vadd.f32 0.0, %v816
        %v818 = vpop.f32.mrf.mxu0
        %819 = vdwg.mxu0
        %v820 = vadd.f32 %v798, %v817
        %821 = vst [vmem:[#allocation1] ss:$4 sm:$0xff] %v244
        %v822 = vld.sshfl [vmem:[#allocation1] sm:$0xff pattern:$0x73625140]
        %824 = vrot.lane.b32.xlu0 %v822, 127
        %v825 = vpop.permute.xlu0 %824
        %v827 = vsel %vm260, %v825, 0
        %829 = vmatpush.bf16.msra.mxu0 0
        %830 = vmatpush.bf16.msra.mxu0 0
        %831 = vmatpush.bf16.msra.mxu0 0
        %832 = vmatpush.bf16.msra.mxu0 0
        %833 = vmatpush.bf16.msra.mxu0 0
        %834 = vmatpush.bf16.msra.mxu0 0
        %835 = vmatpush.bf16.msra.mxu0 0
        %836 = vmatpush.bf16.msra.mxu0 %v827
        %837 = vmatmul.bf16.gmra.mxu0 %v258
        %v838 = vpop.f32.mrf.mxu0
        %v839 = vadd.f32 0.0, %v838
        %v840 = vpop.f32.mrf.mxu0
        %841 = vdwg.mxu0
        %842 = vmatpush.bf16.msra.mxu0 0
        %843 = vmatpush.bf16.msra.mxu0 0
        %844 = vmatpush.bf16.msra.mxu0 0
        %845 = vmatpush.bf16.msra.mxu0 0
        %846 = vmatpush.bf16.msra.mxu0 0
        %847 = vmatpush.bf16.msra.mxu0 0
        %848 = vmatpush.bf16.msra.mxu0 0
        %849 = vmatpush.bf16.msra.mxu0 %v345
        %850 = vmatmul.bf16.gmra.mxu0 %v278
        %v851 = vpop.f32.mrf.mxu0
        %v852 = vadd.f32 %v839, %v851
        %v853 = vpop.f32.mrf.mxu0
        %854 = vdwg.mxu0
        %855 = vst [vmem:[#allocation1] ss:$4 sm:$0xff] %v245
        %v856 = vld.sshfl [vmem:[#allocation1] sm:$0xff pattern:$0x73625140]
        %858 = vrot.lane.b32.xlu0 %v856, 127
        %v859 = vpop.permute.xlu0 %858
        %v861 = vsel %vm260, %v859, 0
        %863 = vmatpush.bf16.msra.mxu0 0
        %864 = vmatpush.bf16.msra.mxu0 0
        %865 = vmatpush.bf16.msra.mxu0 0
        %866 = vmatpush.bf16.msra.mxu0 0
        %867 = vmatpush.bf16.msra.mxu0 0
        %868 = vmatpush.bf16.msra.mxu0 0
        %869 = vmatpush.bf16.msra.mxu0 0
        %870 = vmatpush.bf16.msra.mxu0 %v861
        %871 = vmatmul.bf16.gmra.mxu0 %v302
        %v872 = vpop.f32.mrf.mxu0
        %v873 = vadd.f32 0.0, %v872
        %v874 = vpop.f32.mrf.mxu0
        %875 = vdwg.mxu0
        %v876 = vadd.f32 %v852, %v873
        %877 = vst [vmem:[#allocation1] ss:$4 sm:$0xff] %v243
        %v878 = vld.sshfl [vmem:[#allocation1] sm:$0xff pattern:$0x73625140]
        %880 = vrot.lane.b32.xlu0 %v878, 119
        %v881 = vpop.permute.xlu0 %880
        %v883 = vsel %vm260, %v881, 0
        %885 = vmatpush.bf16.msra.mxu0 0
        %886 = vmatpush.bf16.msra.mxu0 0
        %887 = vmatpush.bf16.msra.mxu0 0
        %888 = vmatpush.bf16.msra.mxu0 0
        %889 = vmatpush.bf16.msra.mxu0 0
        %890 = vmatpush.bf16.msra.mxu0 0
        %891 = vmatpush.bf16.msra.mxu0 0
        %892 = vmatpush.bf16.msra.mxu0 %v883
        %893 = vmatmul.bf16.gmra.mxu0 %v322
        %v894 = vpop.f32.mrf.mxu0
        %v895 = vadd.f32 0.0, %v894
        %v896 = vpop.f32.mrf.mxu0
        %897 = vdwg.mxu0
        %v898 = vadd.f32 %v876, %v895
        %899 = vst [vmem:[#allocation1] ss:$4 sm:$0xff] %v242
        %v900 = vld.sshfl [vmem:[#allocation1] sm:$0xff pattern:$0x73625140]
        %902 = vrot.lane.b32.xlu0 %v900, 118
        %v903 = vpop.permute.xlu0 %902
        %v905 = vsel %vm260, %v903, 0
        %907 = vmatpush.bf16.msra.mxu0 0
        %908 = vmatpush.bf16.msra.mxu0 0
        %909 = vmatpush.bf16.msra.mxu0 0
        %910 = vmatpush.bf16.msra.mxu0 0
        %911 = vmatpush.bf16.msra.mxu0 0
        %912 = vmatpush.bf16.msra.mxu0 0
        %913 = vmatpush.bf16.msra.mxu0 0
        %914 = vmatpush.bf16.msra.mxu0 %v905
        %915 = vmatmul.bf16.gmra.mxu0 %v342
        %v916 = vpop.f32.mrf.mxu0
        %v917 = vadd.f32 0.0, %v916
        %v918 = vpop.f32.mrf.mxu0
        %919 = vdwg.mxu0
        %v920 = vadd.f32 %v898, %v917
        %921 = vst [vmem:[#allocation1] ss:$4 sm:$0xff] %v243
        %v922 = vld.sshfl [vmem:[#allocation1] sm:$0xff pattern:$0x73625140]
        %924 = vrot.lane.b32.xlu0 %v922, 118
        %v925 = vpop.permute.xlu0 %924
        %v927 = vsel %vm260, %v925, 0
        %929 = vmatpush.bf16.msra.mxu0 0
        %930 = vmatpush.bf16.msra.mxu0 0
        %931 = vmatpush.bf16.msra.mxu0 0
        %932 = vmatpush.bf16.msra.mxu0 0
        %933 = vmatpush.bf16.msra.mxu0 0
        %934 = vmatpush.bf16.msra.mxu0 0
        %935 = vmatpush.bf16.msra.mxu0 0
        %936 = vmatpush.bf16.msra.mxu0 %v927
        %937 = vmatmul.bf16.gmra.mxu0 %v367
        %v938 = vpop.f32.mrf.mxu0
        %v939 = vadd.f32 0.0, %v938
        %v940 = vpop.f32.mrf.mxu0
        %941 = vdwg.mxu0
        %v942 = vadd.f32 %v920, %v939
        %943 = vst [vmem:[#allocation1] ss:$4 sm:$0xff] %v245
        %v944 = vld.sshfl [vmem:[#allocation1] sm:$0xff pattern:$0x73625140]
        %946 = vrot.lane.b32.xlu0 %v944, 119
        %v947 = vpop.permute.xlu0 %946
        %v949 = vsel %vm260, %v947, 0
        %951 = vmatpush.bf16.msra.mxu0 0
        %952 = vmatpush.bf16.msra.mxu0 0
        %953 = vmatpush.bf16.msra.mxu0 0
        %954 = vmatpush.bf16.msra.mxu0 0
        %955 = vmatpush.bf16.msra.mxu0 0
        %956 = vmatpush.bf16.msra.mxu0 0
        %957 = vmatpush.bf16.msra.mxu0 0
        %958 = vmatpush.bf16.msra.mxu0 %v949
        %959 = vmatmul.bf16.gmra.mxu0 %v392
        %v960 = vpop.f32.mrf.mxu0
        %v961 = vadd.f32 0.0, %v960
        %v962 = vpop.f32.mrf.mxu0
        %963 = vdwg.mxu0
        %v964 = vadd.f32 %v942, %v961
        %965 = vst [vmem:[#allocation1] ss:$4 sm:$0xff] %v244
        %v966 = vld.sshfl [vmem:[#allocation1] sm:$0xff pattern:$0x73625140]
        %968 = vrot.lane.b32.xlu0 %v966, 118
        %v969 = vpop.permute.xlu0 %968
        %v971 = vsel %vm260, %v969, 0
        %973 = vmatpush.bf16.msra.mxu0 0
        %974 = vmatpush.bf16.msra.mxu0 0
        %975 = vmatpush.bf16.msra.mxu0 0
        %976 = vmatpush.bf16.msra.mxu0 0
        %977 = vmatpush.bf16.msra.mxu0 0
        %978 = vmatpush.bf16.msra.mxu0 0
        %979 = vmatpush.bf16.msra.mxu0 0
        %980 = vmatpush.bf16.msra.mxu0 %v971
        %981 = vmatmul.bf16.gmra.mxu0 %v417
        %v982 = vpop.f32.mrf.mxu0
        %v983 = vadd.f32 0.0, %v982
        %v984 = vpop.f32.mrf.mxu0
        %985 = vdwg.mxu0
        %v986 = vadd.f32 %v964, %v983
        %987 = vst [vmem:[#allocation1] ss:$4 sm:$0xff] %v245
        %v988 = vld.sshfl [vmem:[#allocation1] sm:$0xff pattern:$0x73625140]
        %990 = vrot.lane.b32.xlu0 %v988, 118
        %v991 = vpop.permute.xlu0 %990
        %v993 = vsel %vm260, %v991, 0
        %995 = vmatpush.bf16.msra.mxu0 0
        %996 = vmatpush.bf16.msra.mxu0 0
        %997 = vmatpush.bf16.msra.mxu0 0
        %998 = vmatpush.bf16.msra.mxu0 0
        %999 = vmatpush.bf16.msra.mxu0 0
        %1000 = vmatpush.bf16.msra.mxu0 0
        %1001 = vmatpush.bf16.msra.mxu0 0
        %1002 = vmatpush.bf16.msra.mxu0 %v993
        %1003 = vmatmul.bf16.gmra.mxu0 %v442
        %v1004 = vpop.f32.mrf.mxu0
        %v1005 = vadd.f32 0.0, %v1004
        %v1006 = vpop.f32.mrf.mxu0
        %1007 = vdwg.mxu0
        %v1008 = vadd.f32 %v986, %v1005
        %v1009 = vmax.f32 %v460, %v640
        %v1010 = vmax.f32 %v820, %v1008
        %v1011 = vmax.f32 %v1009, %v1010
        %v1012 = vmin.f32 %v460, %v640
        %v1013 = vmin.f32 %v820, %v1008
        %v1014 = vmin.f32 %v1012, %v1013
        %v1015 = vpack.c.bf16 %v1011, %v1011
        %vm1016 = vcmask 584704
        %1017 = vst.msk [vmem:[%s221] sm:$0xf] %vm1016, %v1015
        %v1018 = vpack.c.bf16 %v1014, %v1014
        %1019 = vst.msk [vmem:[%s228] sm:$0xf] %vm1016, %v1018
        %v1021 = vperm.slane %v255, 0
        %v1023 = vmul.f32 %v460, %v1021
        %vm1024 = vcmask 588800
        %v1025 = vsel %vm1024, %v1023, 0.0
        %1026 = vadd.xlane.f32.xlu0 %v1025
        %v1027 = vpop.xlane.xlu0 %1026
        %v1028 = vadd.f32 %v1027, 0.0
        %v1029 = vmul.f32 %v460, %v1023
        %v1030 = vsel %vm1024, %v1029, 0.0
        %1031 = vadd.xlane.f32.xlu0 %v1030
        %v1032 = vpop.xlane.xlu0 %1031
        %v1033 = vadd.f32 %v1032, 0.0
        %v1034 = vmul.f32 %v640, %v1021
        %v1035 = vsel %vm1024, %v1034, 0.0
        %1036 = vadd.xlane.f32.xlu0 %v1035
        %v1037 = vpop.xlane.xlu0 %1036
        %v1038 = vadd.f32 %v1028, %v1037
        %v1039 = vmul.f32 %v640, %v1034
        %v1040 = vsel %vm1024, %v1039, 0.0
        %1041 = vadd.xlane.f32.xlu0 %v1040
        %v1042 = vpop.xlane.xlu0 %1041
        %v1043 = vadd.f32 %v1033, %v1042
        %v1044 = vmul.f32 %v820, %v1021
        %v1045 = vsel %vm1024, %v1044, 0.0
        %1046 = vadd.xlane.f32.xlu0 %v1045
        %v1047 = vpop.xlane.xlu0 %1046
        %v1048 = vadd.f32 %v1038, %v1047
        %v1049 = vmul.f32 %v820, %v1044
        %v1050 = vsel %vm1024, %v1049, 0.0
        %1051 = vadd.xlane.f32.xlu0 %v1050
        %v1052 = vpop.xlane.xlu0 %1051
        %v1053 = vadd.f32 %v1043, %v1052
        %v1054 = vmul.f32 %v1008, %v1021
        %v1055 = vsel %vm1024, %v1054, 0.0
        %1056 = vadd.xlane.f32.xlu0 %v1055
        %v1057 = vpop.xlane.xlu0 %1056
        %v1058 = vadd.f32 %v1048, %v1057
        %v1059 = vmul.f32 %v1008, %v1054
        %v1060 = vsel %vm1024, %v1059, 0.0
        %1061 = vadd.xlane.f32.xlu0 %v1060
        %v1062 = vpop.xlane.xlu0 %1061
        %v1063 = vadd.f32 %v1053, %v1062
        %v1065 = vlaneseq
        %v1066 = vand.u32 %v1065, 127
        %v1067 = vperm.slane %v1058, %v1066
        %vm1069 = vcmask 57344
        %1070 = vst.msk [vmem:[%s235] sm:$0x1] %vm1069, %v1067
        %v1072 = vperm.slane %v1063, %v1066
        %1074 = vst.msk [vmem:[%s235 + $0x1] sm:$0x1] %vm1069, %v1072
        %s1075 = sand.u32 %s99, 1
        %s1076 = scalar_lea.sflag [#allocation3], %s1075
        %s1077 = sand.u32 %s99, 1
        %s1078 = smul.addr %s1077, 4
        %s1079 = scalar_lea.vmem [#allocation2], %s1078
        %s1080 = sand.u32 %s23, 1
        %s1081 = scalar_lea.sflag [#allocation5], %s1080
        %s1082 = sand.u32 %s125, 1
        %s1083 = smul.addr %s1082, 4
        %s1084 = scalar_lea.vmem [#allocation4], %s1083
        %s1085 = sand.u32 %s23, 1
        %s1086 = scalar_lea.sflag [#allocation5], %s1085
        %s1087 = sand.u32 %s151, 1
        %s1088 = smul.addr %s1087, 2
        %s1089 = scalar_lea.vmem [#allocation6], %s1088
        // Predicated region
        $region33: #{tpu_custom_call.1} parent=31 // pred_check
          %p1090 = pneg %p109
        $region34: #{tpu_custom_call.1} parent=31 // pred_check_branch
          %1092 = sbr.rel (%p1090) target = $region36
        $region35: #{tpu_custom_call.1} parent=31 // pred_region
          %1094 = vsyncadd %s1076, 0
          %s1095 = smul.addr %s23, 4
          %s1096 = scalar_lea.hbm %s3, %s1095
          %s1098 = sshll.u32 %s1079, 4
          %s1099 = int_to_ptr.vmem [resolvable:$true] %s1098
          %s1100 = sshll.u32 %s1096, 4
          %s1101 = int_to_ptr.hbm [resolvable:$true] %s1100
          %1103 = dma.vmem_to_hbm [thread:$0]  %s1099, 64, %s1101, %s1076
        $region36: #{tpu_custom_call.1} parent=31 // pred_fallthru
          _
        // Predicated region
        $region37: #{tpu_custom_call.1} parent=31 // pred_check
          %p1104 = pneg %p135
        $region38: #{tpu_custom_call.1} parent=31 // pred_check_branch
          %1106 = sbr.rel (%p1104) target = $region40
        $region39: #{tpu_custom_call.1} parent=31 // pred_region
          %1108 = vsyncadd %s1081, 0
          %s1109 = smul.addr %s23, 4
          %s1110 = scalar_lea.hbm %s4, %s1109
          %s1112 = sshll.u32 %s1084, 4
          %s1113 = int_to_ptr.vmem [resolvable:$true] %s1112
          %s1114 = sshll.u32 %s1110, 4
          %s1115 = int_to_ptr.hbm [resolvable:$true] %s1114
          %1117 = dma.vmem_to_hbm [thread:$0]  %s1113, 64, %s1115, %s1081
        $region40: #{tpu_custom_call.1} parent=31 // pred_fallthru
          _
        // Predicated region
        $region41: #{tpu_custom_call.1} parent=31 // pred_check
          %p1118 = pneg %p161
        $region42: #{tpu_custom_call.1} parent=31 // pred_check_branch
          %1120 = sbr.rel (%p1118) target = $region44
        $region43: #{tpu_custom_call.1} parent=31 // pred_region
          %1122 = vsyncadd %s1086, 0
          %s1123 = smul.addr %s23, 2
          %s1124 = scalar_lea.hbm %s5, %s1123
          %s1126 = sshll.u32 %s1089, 4
          %s1127 = int_to_ptr.vmem [resolvable:$true] %s1126
          %s1128 = sshll.u32 %s1124, 4
          %s1129 = int_to_ptr.hbm [resolvable:$true] %s1128
          %1131 = dma.vmem_to_hbm [thread:$0]  %s1127, 32, %s1129, %s1086
        $region44: #{tpu_custom_call.1} parent=31 // pred_fallthru
          _
      $region32: #{tpu_custom_call.1} parent=5 // pred_fallthru
        _
      %p1132 = scmp.le.s32.totalorder 2, %s18
      // Predicated region
      $region45: #{tpu_custom_call.1} parent=5 // pred_check
        %p1133 = pneg %p1132
      $region46: #{tpu_custom_call.1} parent=5 // pred_check_branch
        %1135 = sbr.rel (%p1133) target = $region48
      $region47: #{tpu_custom_call.1} parent=5 // pred_region
        %s1136 = ssub.s32 %s18, 2
        // Predicated region
        $region49: #{tpu_custom_call.1} parent=47 // pred_check
          %p1137 = pneg %p115
        $region50: #{tpu_custom_call.1} parent=47 // pred_check_branch
          %1139 = sbr.rel (%p1137) target = $region52
        $region51: #{tpu_custom_call.1} parent=47 // pred_region
          %s1140 = sand.u32 %s100, 1
          %s1141 = scalar_lea.sflag [#allocation3], %s1140
          %s1142 = sand.u32 %s100, 1
          %s1143 = smul.addr %s1142, 4
          %s1144 = scalar_lea.vmem [#allocation2], %s1143
          %1146 = dma.done %s1141, 64
        $region52: #{tpu_custom_call.1} parent=47 // pred_fallthru
          _
        // Predicated region
        $region53: #{tpu_custom_call.1} parent=47 // pred_check
          %p1147 = pneg %p141
        $region54: #{tpu_custom_call.1} parent=47 // pred_check_branch
          %1149 = sbr.rel (%p1147) target = $region56
        $region55: #{tpu_custom_call.1} parent=47 // pred_region
          %s1150 = sand.u32 %s24, 1
          %s1151 = scalar_lea.sflag [#allocation5], %s1150
          %s1152 = sand.u32 %s126, 1
          %s1153 = smul.addr %s1152, 4
          %s1154 = scalar_lea.vmem [#allocation4], %s1153
          %1156 = dma.done %s1151, 64
        $region56: #{tpu_custom_call.1} parent=47 // pred_fallthru
          _
        // Predicated region
        $region57: #{tpu_custom_call.1} parent=47 // pred_check
          %p1157 = pneg %p167
        $region58: #{tpu_custom_call.1} parent=47 // pred_check_branch
          %1159 = sbr.rel (%p1157) target = $region60
        $region59: #{tpu_custom_call.1} parent=47 // pred_region
          %s1160 = sand.u32 %s24, 1
          %s1161 = scalar_lea.sflag [#allocation5], %s1160
          %s1162 = sand.u32 %s152, 1
          %s1163 = smul.addr %s1162, 2
          %s1164 = scalar_lea.vmem [#allocation6], %s1163
          %1166 = dma.done %s1161, 32
        $region60: #{tpu_custom_call.1} parent=47 // pred_fallthru
          _
      $region48: #{tpu_custom_call.1} parent=5 // pred_fallthru
        _
    $region6: #{tpu_custom_call.1} parent=1 // loop_footer
      %s22 = sadd.s32 1, %s18
    $region7: #{tpu_custom_call.1} parent=1 // loop_footer_branch
      %17 = sbr.rel target = $region3
    $region8: #{tpu_custom_call.1} parent=1 // loop_exit
      _
    %1167 = vsyncpa [#allocation3], 1
    %s1168 = scalar_lea.sflag [#allocation3], 1
    %1169 = vsyncpa %s1168, 1
    %1170 = vsyncpa [#allocation5], 1
    %s1171 = scalar_lea.sflag [#allocation5], 1
    %1172 = vsyncpa %s1171, 1

</llo_original>
